<compile_context>
chip_gen: v7x
topology: tpu7x:2x2x1
jax: 0.10.0
libtpu: 0.0.40
codegen_flags: <defaults>
</compile_context>

<pallas_src>
import jax
import jax.numpy as jnp
from jax.experimental import pallas as pl
from jax.experimental.pallas import tpu as pltpu

LEAK = 0.1   # GeneralRelu(leak=0.1, sub=0.4) as used by radionets conv/depth_conv
SUB = 0.4
EPS = 1e-5   # BatchNorm2d default eps
K = 7
KK = K * K            # 49 taps per depth conv
KPAD = 112            # 2*49 = 98 padded up to a multiple of 16 (bf16 sublane packing)
TILE_HW_MAX = 2048    # lane-tile size: double-buffered bf16 patch tiles + f32
                      # intermediates stay well under the 16 MiB default scoped
                      # VMEM of v5e (and the 32 MiB defaults of v6e / v7x)


def _general_relu(x):
    return jnp.where(x >= 0, x, LEAK * x) - SUB


def _round_up(n, m):
    return (n + m - 1) // m * m


# ---------------------------------------------------------------------------
# Pallas kernel: one grid step per (batch element, HW tile).
# ---------------------------------------------------------------------------
def _dsc_kernel(pblk_ref, wblk_ref, bd_ref, wp_ref, pb_ref, out_ref):
    # pblk_ref: (1, 2, KPAD, T) bf16  VMEM  taps x pixels, one row-block per branch pair
    # wblk_ref: (2, 128, KPAD)  bf16  VMEM  block-diag depth weights (BN scale folded)
    # bd_ref:   (2, 128, 1)     f32   VMEM  folded conv bias + BN shift (depth)
    # wp_ref:   (2, 1, 128)     f32   VMEM  pointwise 1x1 weights (BN scale folded)
    # pb_ref:   (2,)            f32   SMEM  folded pointwise bias + BN shift
    # out_ref:  (1, 2, T)       f32   VMEM
    rows = []
    for br in range(2):                                        # br 0 = real, 1 = imag
        p = pblk_ref[0, br]                                    # (KPAD, T) bf16
        # One MXU matmul produces the concatenated [dil=2 | dil=1] 128-channel slab.
        comb = jnp.dot(wblk_ref[br], p,
                       preferred_element_type=jnp.float32)     # (128, T) f32
        comb = _general_relu(comb + bd_ref[br])                # bias/BN shift + relu
        # 1x1 pointwise conv + BN(1) as a second (tiny) MXU matmul.
        z = jnp.dot(wp_ref[br], comb,
                    preferred_element_type=jnp.float32)        # (1, T) f32
        rows.append(_general_relu(z + pb_ref[br]))
    out_ref[0] = jnp.concatenate(rows, axis=0)                 # (2, T), lane-dense


# ---------------------------------------------------------------------------
# Glue: taps-first im2col + pallas_call wrapper.
# ---------------------------------------------------------------------------
def _im2col_taps(img, dilation, padding, H, W):
    # img: (B, H, W) single-channel plane -> (B, 49, H*W).
    # Rows are the 7x7 kernel taps (kh*7 + kw); columns are spatial positions in
    # row-major (h, w) order (matches NCHW flattening of the PyTorch output).
    B = img.shape[0]
    xp = jnp.pad(img, ((0, 0), (padding, padding), (padding, padding)))
    taps = []
    for kh in range(K):
        for kw in range(K):
            taps.append(xp[:, kh * dilation:kh * dilation + H,
                           kw * dilation:kw * dilation + W])
    return jnp.stack(taps, axis=1).reshape(B, KK, H * W)


def dsc_forward(x, kernel_params):
    # x: (B, 2, H, W) float32 NCHW, channel 0 = real, channel 1 = imag.
    wblk, bd, wp, pb = kernel_params
    B, C, H, W = x.shape
    assert C == 2
    HW = H * W

    T = min(TILE_HW_MAX, _round_up(HW, 128))   # lane-tile (multiple of 128)
    HWp = _round_up(HW, T)                     # padded lane extent

    real = x[:, 0]
    imag = x[:, 1]
    # Branch pair 0 (real plane):  rows 0..48 = dil=2/pad=6 taps, 49..97 = dil=1/pad=3.
    # Branch pair 1 (imag plane):  same.
    pblk = jnp.stack(
        [
            jnp.concatenate([_im2col_taps(real, 2, 6, H, W),
                             _im2col_taps(real, 1, 3, H, W)], axis=1),
            jnp.concatenate([_im2col_taps(imag, 2, 6, H, W),
                             _im2col_taps(imag, 1, 3, H, W)], axis=1),
        ],
        axis=1,
    )                                                          # (B, 2, 98, HW) f32
    pblk = jnp.pad(pblk, ((0, 0), (0, 0), (0, KPAD - 2 * KK), (0, HWp - HW)))
    pblk = pblk.astype(jnp.bfloat16)                           # halve HBM traffic

    out = pl.pallas_call(
        _dsc_kernel,
        out_shape=jax.ShapeDtypeStruct((B, 2, HWp), jnp.float32),
        grid=(B, HWp // T),
        in_specs=[
            pl.BlockSpec((1, 2, KPAD, T), lambda b, t: (b, 0, 0, t)),
            pl.BlockSpec((2, 128, KPAD), lambda b, t: (0, 0, 0)),
            pl.BlockSpec((2, 128, 1), lambda b, t: (0, 0, 0)),
            pl.BlockSpec((2, 1, 128), lambda b, t: (0, 0, 0)),
            pl.BlockSpec(memory_space=pltpu.MemorySpace.SMEM),
        ],
        out_specs=pl.BlockSpec((1, 2, T), lambda b, t: (b, 0, t)),
        compiler_params=pltpu.CompilerParams(
            dimension_semantics=("parallel", "parallel"),
            vmem_limit_bytes=32 * 1024 * 1024,
        ),
    )(pblk, wblk, bd, wp, pb)
    return out[:, :, :HW]                                      # strip HW padding


# ---------------------------------------------------------------------------
# Deterministic parameter init (synthetic, PRNGKey-based) + folding.
# ---------------------------------------------------------------------------
def make_raw_params(key):
    ks = jax.random.split(key, 12)
    return {
        # depth convs: PyTorch weight shape (64, 1, 7, 7) per branch
        "wd": 0.05 * jax.random.normal(ks[0], (4, 64, K, K), jnp.float32),
        "bd": 0.05 * jax.random.normal(ks[1], (4, 64), jnp.float32),
        "gd": 1.0 + 0.1 * jax.random.normal(ks[2], (4, 64), jnp.float32),
        "betad": 0.1 * jax.random.normal(ks[3], (4, 64), jnp.float32),
        "md": 0.1 * jax.random.normal(ks[4], (4, 64), jnp.float32),
        "vd": 1.0 + 0.1 * jax.random.uniform(ks[5], (4, 64), jnp.float32),
        # pointwise convs: PyTorch weight shape (1, 128, 1, 1) per branch
        "wp": 0.05 * jax.random.normal(ks[6], (2, 128), jnp.float32),
        "bp": 0.05 * jax.random.normal(ks[7], (2,), jnp.float32),
        "gp": 1.0 + 0.1 * jax.random.normal(ks[8], (2,), jnp.float32),
        "betap": 0.1 * jax.random.normal(ks[9], (2,), jnp.float32),
        "mp": 0.1 * jax.random.normal(ks[10], (2,), jnp.float32),
        "vp": 1.0 + 0.1 * jax.random.uniform(ks[11], (2,), jnp.float32),
    }


def fold_params(rp):
    # Depth branches: fold conv bias + BN into per-channel scale/shift, then fold
    # the scale into the weights so the kernel only needs an additive shift.
    sd = rp["gd"] / jnp.sqrt(rp["vd"] + EPS)                   # (4, 64)
    bd4 = sd * (rp["bd"] - rp["md"]) + rp["betad"]             # (4, 64)
    wd = rp["wd"].reshape(4, 64, KK) * sd[:, :, None]          # (4, 64, 49), scale folded

    # Block-diagonal packing: pair 0 = (depth1 dil=2, depth12 dil=1) on the real
    # plane; pair 1 = (depth2, depth21) on the imaginary plane.  Column order
    # matches the patch row order [dil=2 taps | dil=1 taps | zero pad].
    wblk = jnp.zeros((2, 128, KPAD), jnp.float32)
    wblk = wblk.at[0, 0:64, 0:KK].set(wd[0])
    wblk = wblk.at[0, 64:128, KK:2 * KK].set(wd[1])
    wblk = wblk.at[1, 0:64, 0:KK].set(wd[2])
    wblk = wblk.at[1, 64:128, KK:2 * KK].set(wd[3])
    bd = jnp.stack([jnp.concatenate([bd4[0], bd4[1]]),
                    jnp.concatenate([bd4[2], bd4[3]])])[:, :, None]   # (2, 128, 1)

    # Pointwise 1x1 conv + BN(1): fold the BN scale into the weights too.
    ps = rp["gp"] / jnp.sqrt(rp["vp"] + EPS)                   # (2,)
    pb = ps * (rp["bp"] - rp["mp"]) + rp["betap"]              # (2,)
    wp = (rp["wp"] * ps[:, None])[:, None, :]                  # (2, 1, 128)

    return (wblk.astype(jnp.bfloat16), bd.astype(jnp.float32),
            wp.astype(jnp.float32), pb.astype(jnp.float32))


# ---------------------------------------------------------------------------
# Pure-JAX f32 reference (mirrors the PyTorch forward) for validation.
# ---------------------------------------------------------------------------
def dsc_reference(x, rp):
    B, _, H, W = x.shape
    hp = jax.lax.Precision.HIGHEST

    def depth_branch(inp, idx, dil, pad):
        w = rp["wd"][idx][:, None, :, :]                       # (64, 1, 7, 7)
        y = jax.lax.conv_general_dilated(
            inp, w, window_strides=(1, 1), padding=[(pad, pad), (pad, pad)],
            rhs_dilation=(dil, dil), dimension_numbers=("NCHW", "OIHW", "NCHW"),
            precision=hp)
        y = y + rp["bd"][idx][None, :, None, None]
        y = (rp["gd"][idx][None, :, None, None]
             * (y - rp["md"][idx][None, :, None, None])
             / jnp.sqrt(rp["vd"][idx][None, :, None, None] + EPS)
             + rp["betad"][idx][None, :, None, None])
        return _general_relu(y)

    inp_real = x[:, 0:1]
    inp_imag = x[:, 1:2]
    depth1 = depth_branch(inp_real, 0, 2, 6)
    depth12 = depth_branch(inp_real, 1, 1, 3)
    depth2 = depth_branch(inp_imag, 2, 2, 6)
    depth21 = depth_branch(inp_imag, 3, 1, 3)

    def point_branch(comb, idx):
        z = jnp.einsum("bchw,c->bhw", comb, rp["wp"][idx], precision=hp) + rp["bp"][idx]
        z = rp["gp"][idx] * (z - rp["mp"][idx]) / jnp.sqrt(rp["vp"][idx] + EPS) + rp["betap"][idx]
        return _general_relu(z)

    point1 = point_branch(jnp.concatenate([depth1, depth12], axis=1), 0)
    point2 = point_branch(jnp.concatenate([depth2, depth21], axis=1), 1)
    comb = jnp.stack([point1, point2], axis=1)                 # (B, 2, H, W)
    return comb.reshape(B, 2, H * W)                           # flatten_with_channel


if __name__ == "__main__":
    key = jax.random.PRNGKey(0)
    kx, kp = jax.random.split(key)

    B, H, W = 2, 16, 16
    x = jax.random.normal(kx, (B, 2, H, W), jnp.float32)       # NCHW, 2 = (real, imag)

    raw = make_raw_params(kp)
    kernel_params = fold_params(raw)

    out = jax.block_until_ready(dsc_forward(x, kernel_params))
    ref = jax.block_until_ready(dsc_reference(x, raw))

    assert out.shape == (B, 2, H * W), out.shape
    assert jnp.all(jnp.isfinite(out))
    # bf16 MXU operands with f32 accumulation: tolerance relaxed vs a pure-f32
    # path, still ~1-2% of the output scale.
    max_err = float(jnp.max(jnp.abs(out - ref)))
    assert jnp.allclose(out, ref, rtol=5e-3, atol=5e-3), max_err

    print("KERNEL_OK")
</pallas_src>

<mosaic_0001>
module attributes {stable_mosaic.version = 11 : i64} {
  func.func @_dsc_kernel(%arg0: i32, %arg1: i32, %arg2: memref<1x2x112x256xbf16, #tpu.memory_space<vmem>>, %arg3: memref<2x128x112xbf16, #tpu.memory_space<vmem>>, %arg4: memref<2x128x1xf32, #tpu.memory_space<vmem>>, %arg5: memref<2x1x128xf32, #tpu.memory_space<vmem>>, %arg6: memref<2xf32, #tpu.memory_space<smem>>, %arg7: memref<1x2x256xf32, #tpu.memory_space<vmem>>) attributes {dimension_semantics = [#tpu.dimension_semantics<parallel>, #tpu.dimension_semantics<parallel>], iteration_bounds = array<i64: 2, 1>, scalar_prefetch = 0 : i64, scratch_operands = 0 : i64, tpu.core_type = #tpu.core_type<tc>, window_params = [{transform_indices = @transform_0, window_bounds = array<i64: 1, 2, 112, 256>}, {pipeline_mode = #tpu.pipeline_mode<synchronous>, transform_indices = @transform_1, window_bounds = array<i64: 2, 128, 112>}, {pipeline_mode = #tpu.pipeline_mode<synchronous>, transform_indices = @transform_2, window_bounds = array<i64: 2, 128, 1>}, {pipeline_mode = #tpu.pipeline_mode<synchronous>, transform_indices = @transform_3, window_bounds = array<i64: 2, 1, 128>}, {transform_indices = @transform_4, window_bounds = array<i64: 2>}, {transform_indices = @transform_5, window_bounds = array<i64: 1, 2, 256>}]} {
    %c0 = arith.constant 0 : index
    %c0_0 = arith.constant 0 : index
    %c0_1 = arith.constant 0 : index
    %c0_2 = arith.constant 0 : index
    %0 = vector.load %arg2[%c0, %c0_0, %c0_1, %c0_2] : memref<1x2x112x256xbf16, #tpu.memory_space<vmem>>, vector<1x1x112x256xbf16>
    %1 = vector.shape_cast %0 : vector<1x1x112x256xbf16> to vector<112x256xbf16>
    %c0_3 = arith.constant 0 : index
    %c0_4 = arith.constant 0 : index
    %c0_5 = arith.constant 0 : index
    %2 = vector.load %arg3[%c0_3, %c0_4, %c0_5] : memref<2x128x112xbf16, #tpu.memory_space<vmem>>, vector<1x128x112xbf16>
    %3 = vector.shape_cast %2 : vector<1x128x112xbf16> to vector<128x112xbf16>
    %cst = arith.constant dense<0.000000e+00> : vector<128x256xf32>
    %4 = tpu.matmul %3, %1, %cst {dimension_numbers = #tpu.dot_dimension_numbers<[1], [0], [0], [1], [0, 0, 1, 1], [], []>} : vector<128x112xbf16>, vector<112x256xbf16>, vector<128x256xf32> -> vector<128x256xf32>
    %c0_6 = arith.constant 0 : index
    %c0_7 = arith.constant 0 : index
    %c0_8 = arith.constant 0 : index
    %5 = vector.load %arg4[%c0_6, %c0_7, %c0_8] : memref<2x128x1xf32, #tpu.memory_space<vmem>>, vector<1x128x1xf32>
    %6 = vector.shape_cast %5 : vector<1x128x1xf32> to vector<128x1xf32>
    %7 = vector.broadcast %6 : vector<128x1xf32> to vector<128x256xf32>
    %8 = arith.addf %4, %7 : vector<128x256xf32>
    %cst_9 = arith.constant 0.000000e+00 : f32
    %9 = vector.broadcast %cst_9 : f32 to vector<128x256xf32>
    %10 = arith.cmpf oge, %8, %9 : vector<128x256xf32>
    %cst_10 = arith.constant 1.000000e-01 : f32
    %11 = vector.broadcast %cst_10 : f32 to vector<128x256xf32>
    %12 = arith.mulf %11, %8 : vector<128x256xf32>
    %13 = arith.select %10, %8, %12 : vector<128x256xi1>, vector<128x256xf32>
    %cst_11 = arith.constant 4.000000e-01 : f32
    %14 = vector.broadcast %cst_11 : f32 to vector<128x256xf32>
    %15 = arith.subf %13, %14 : vector<128x256xf32>
    %c0_12 = arith.constant 0 : index
    %c0_13 = arith.constant 0 : index
    %c0_14 = arith.constant 0 : index
    %16 = vector.load %arg5[%c0_12, %c0_13, %c0_14] : memref<2x1x128xf32, #tpu.memory_space<vmem>>, vector<1x1x128xf32>
    %17 = vector.shape_cast %16 : vector<1x1x128xf32> to vector<1x128xf32>
    %cst_15 = arith.constant dense<0.000000e+00> : vector<1x256xf32>
    %18 = tpu.matmul %17, %15, %cst_15 {dimension_numbers = #tpu.dot_dimension_numbers<[1], [0], [0], [1], [0, 0, 1, 1], [], []>} : vector<1x128xf32>, vector<128x256xf32>, vector<1x256xf32> -> vector<1x256xf32>
    %c0_16 = arith.constant 0 : index
    %19 = memref.load %arg6[%c0_16] : memref<2xf32, #tpu.memory_space<smem>>
    %20 = vector.broadcast %19 : f32 to vector<1x256xf32>
    %21 = arith.addf %18, %20 : vector<1x256xf32>
    %cst_17 = arith.constant 0.000000e+00 : f32
    %22 = vector.broadcast %cst_17 : f32 to vector<1x256xf32>
    %23 = arith.cmpf oge, %21, %22 : vector<1x256xf32>
    %cst_18 = arith.constant 1.000000e-01 : f32
    %24 = vector.broadcast %cst_18 : f32 to vector<1x256xf32>
    %25 = arith.mulf %24, %21 : vector<1x256xf32>
    %26 = arith.select %23, %21, %25 : vector<1x256xi1>, vector<1x256xf32>
    %cst_19 = arith.constant 4.000000e-01 : f32
    %27 = vector.broadcast %cst_19 : f32 to vector<1x256xf32>
    %28 = arith.subf %26, %27 : vector<1x256xf32>
    %c0_20 = arith.constant 0 : index
    %c1 = arith.constant 1 : index
    %c0_21 = arith.constant 0 : index
    %c0_22 = arith.constant 0 : index
    %29 = vector.load %arg2[%c0_20, %c1, %c0_21, %c0_22] : memref<1x2x112x256xbf16, #tpu.memory_space<vmem>>, vector<1x1x112x256xbf16>
    %30 = vector.shape_cast %29 : vector<1x1x112x256xbf16> to vector<112x256xbf16>
    %c1_23 = arith.constant 1 : index
    %c0_24 = arith.constant 0 : index
    %c0_25 = arith.constant 0 : index
    %31 = vector.load %arg3[%c1_23, %c0_24, %c0_25] : memref<2x128x112xbf16, #tpu.memory_space<vmem>>, vector<1x128x112xbf16>
    %32 = vector.shape_cast %31 : vector<1x128x112xbf16> to vector<128x112xbf16>
    %cst_26 = arith.constant dense<0.000000e+00> : vector<128x256xf32>
    %33 = tpu.matmul %32, %30, %cst_26 {dimension_numbers = #tpu.dot_dimension_numbers<[1], [0], [0], [1], [0, 0, 1, 1], [], []>} : vector<128x112xbf16>, vector<112x256xbf16>, vector<128x256xf32> -> vector<128x256xf32>
    %c1_27 = arith.constant 1 : index
    %c0_28 = arith.constant 0 : index
    %c0_29 = arith.constant 0 : index
    %34 = vector.load %arg4[%c1_27, %c0_28, %c0_29] : memref<2x128x1xf32, #tpu.memory_space<vmem>>, vector<1x128x1xf32>
    %35 = vector.shape_cast %34 : vector<1x128x1xf32> to vector<128x1xf32>
    %36 = vector.broadcast %35 : vector<128x1xf32> to vector<128x256xf32>
    %37 = arith.addf %33, %36 : vector<128x256xf32>
    %cst_30 = arith.constant 0.000000e+00 : f32
    %38 = vector.broadcast %cst_30 : f32 to vector<128x256xf32>
    %39 = arith.cmpf oge, %37, %38 : vector<128x256xf32>
    %cst_31 = arith.constant 1.000000e-01 : f32
    %40 = vector.broadcast %cst_31 : f32 to vector<128x256xf32>
    %41 = arith.mulf %40, %37 : vector<128x256xf32>
    %42 = arith.select %39, %37, %41 : vector<128x256xi1>, vector<128x256xf32>
    %cst_32 = arith.constant 4.000000e-01 : f32
    %43 = vector.broadcast %cst_32 : f32 to vector<128x256xf32>
    %44 = arith.subf %42, %43 : vector<128x256xf32>
    %c1_33 = arith.constant 1 : index
    %c0_34 = arith.constant 0 : index
    %c0_35 = arith.constant 0 : index
    %45 = vector.load %arg5[%c1_33, %c0_34, %c0_35] : memref<2x1x128xf32, #tpu.memory_space<vmem>>, vector<1x1x128xf32>
    %46 = vector.shape_cast %45 : vector<1x1x128xf32> to vector<1x128xf32>
    %cst_36 = arith.constant dense<0.000000e+00> : vector<1x256xf32>
    %47 = tpu.matmul %46, %44, %cst_36 {dimension_numbers = #tpu.dot_dimension_numbers<[1], [0], [0], [1], [0, 0, 1, 1], [], []>} : vector<1x128xf32>, vector<128x256xf32>, vector<1x256xf32> -> vector<1x256xf32>
    %c1_37 = arith.constant 1 : index
    %48 = memref.load %arg6[%c1_37] : memref<2xf32, #tpu.memory_space<smem>>
    %49 = vector.broadcast %48 : f32 to vector<1x256xf32>
    %50 = arith.addf %47, %49 : vector<1x256xf32>
    %cst_38 = arith.constant 0.000000e+00 : f32
    %51 = vector.broadcast %cst_38 : f32 to vector<1x256xf32>
    %52 = arith.cmpf oge, %50, %51 : vector<1x256xf32>
    %cst_39 = arith.constant 1.000000e-01 : f32
    %53 = vector.broadcast %cst_39 : f32 to vector<1x256xf32>
    %54 = arith.mulf %53, %50 : vector<1x256xf32>
    %55 = arith.select %52, %50, %54 : vector<1x256xi1>, vector<1x256xf32>
    %cst_40 = arith.constant 4.000000e-01 : f32
    %56 = vector.broadcast %cst_40 : f32 to vector<1x256xf32>
    %57 = arith.subf %55, %56 : vector<1x256xf32>
    %58 = tpu.concatenate %28, %57 in 0 : vector<1x256xf32>, vector<1x256xf32> -> vector<2x256xf32>
    %c0_41 = arith.constant 0 : index
    %c0_42 = arith.constant 0 : index
    %c0_43 = arith.constant 0 : index
    %59 = vector.load %arg7[%c0_41, %c0_42, %c0_43] : memref<1x2x256xf32, #tpu.memory_space<vmem>>, vector<1x2x256xf32>
    %60 = vector.shape_cast %59 : vector<1x2x256xf32> to vector<2x256xf32>
    %61 = vector.shape_cast %58 : vector<2x256xf32> to vector<1x2x256xf32>
    tpu.vector_store %arg7[%c0_41, %c0_42, %c0_43], %61 {strides = array<i32>} : memref<1x2x256xf32, #tpu.memory_space<vmem>>, vector<1x2x256xf32>,
    return
  }
  func.func @transform_0(%arg0: i32, %arg1: i32) -> (i32, i32, i32, i32) {
    %c0_i32 = arith.constant 0 : i32
    %c0_i32_0 = arith.constant 0 : i32
    %c0_i32_1 = arith.constant 0 : i32
    return %arg0, %c0_i32, %c0_i32_0, %arg1 : i32, i32, i32, i32
  }
  func.func @transform_1(%arg0: i32, %arg1: i32) -> (i32, i32, i32) {
    %c0_i32 = arith.constant 0 : i32
    %c0_i32_0 = arith.constant 0 : i32
    %c0_i32_1 = arith.constant 0 : i32
    %c0_i32_2 = arith.constant 0 : i32
    return %c0_i32, %c0_i32_0, %c0_i32_1 : i32, i32, i32
  }
  func.func @transform_2(%arg0: i32, %arg1: i32) -> (i32, i32, i32) {
    %c0_i32 = arith.constant 0 : i32
    %c0_i32_0 = arith.constant 0 : i32
    %c0_i32_1 = arith.constant 0 : i32
    %c0_i32_2 = arith.constant 0 : i32
    return %c0_i32, %c0_i32_0, %c0_i32_1 : i32, i32, i32
  }
  func.func @transform_3(%arg0: i32, %arg1: i32) -> (i32, i32, i32) {
    %c0_i32 = arith.constant 0 : i32
    %c0_i32_0 = arith.constant 0 : i32
    %c0_i32_1 = arith.constant 0 : i32
    %c0_i32_2 = arith.constant 0 : i32
    return %c0_i32, %c0_i32_0, %c0_i32_1 : i32, i32, i32
  }
  func.func @transform_4(%arg0: i32, %arg1: i32) -> i32 {
    %c0_i32 = arith.constant 0 : i32
    %c0_i32_0 = arith.constant 0 : i32
    return %c0_i32 : i32
  }
  func.func @transform_5(%arg0: i32, %arg1: i32) -> (i32, i32, i32) {
    %c0_i32 = arith.constant 0 : i32
    %c0_i32_0 = arith.constant 0 : i32
    return %arg0, %c0_i32, %arg1 : i32, i32, i32
  }
}

</mosaic_0001>

<llo_original>
// kernel: tpu_custom_call.1
$region0: #{tpu_custom_call.1}
  #allocation0 [shape = 'u32[]', space=smem, size = 0x4, offset = 0x4, fixed_abs, tag = 'smem constant byte address 0x4 - core index']
  #allocation1 [shape = 'u32[144,128]{1,0:T(1,128)}', space=vmem, size = 0x12000, scoped, tag = 'internal scratch']
  %s0 = inlined_call_operand.vmem [shape: bf16[2,2,112,256], index: 0, kind: input, shape index: {}]
  %s1 = inlined_call_operand.vmem [shape: bf16[2,128,112], index: 1, kind: input, shape index: {}]
  %s2 = inlined_call_operand.vmem [shape: f32[2,128,1], index: 2, kind: input, shape index: {}]
  %s3 = inlined_call_operand.vmem [shape: f32[2,1,128], index: 3, kind: input, shape index: {}]
  %s4 = inlined_call_operand.vmem [shape: f32[2], index: 4, kind: input, shape index: {}]
  %s5 = inlined_call_operand.hbm [shape: f32[2,2,256], index: 5, kind: output, shape index: {}]
  %s6 = sld [smem:[#allocation0]]
  $region57: #{tpu_custom_call.1} parent=0
    _
  %s8 = ssub.s32 1, %s6
  %s9 = scalar_select 0, %s8, %s6
  $region1: #{tpu_custom_call.1} parent=0
    #allocation2 [shape = 'u8[512]{0}', space=smem, size = 0x200, scoped, tag = 'input window, operand 4, single buffered']
    #allocation3 [shape = 's32[2]{0}', space=sflag, size = 0x8, scoped, tag = 'scoped memory for tpu_custom_call.1']
    #allocation4 [shape = 's32[2]{0}', space=sflag, size = 0x8, scoped, tag = 'scoped memory for tpu_custom_call.1']
    #allocation5 [shape = 'u8[4096]{0}', space=vmem, size = 0x1000, scoped, tag = 'output window, operand 0']
    %10 = vsyncpa [#allocation4], 0
    %11 = vsyncpa [#allocation3], 0
    %s12 = scalar_lea.sflag [#allocation3], 1
    %13 = vsyncpa %s12, 0
    loop: start=0, step=1, limit=4
    $region2: #{tpu_custom_call.1} parent=1 // loop_pre_header
      _
    $region3: #{tpu_custom_call.1} parent=1 // loop_header
      %s15 = sphi 0, %s19
      %p16 = scmp.ge.s32.totalorder %s15, 4
      %s22 = sphi 0, %s34
      %s23 = sphi 0, %s30
      %s24 = sphi 0, %s22
      %s25 = sphi 0, %s23
      %s26 = sphi 0, %s24
      %s27 = sphi 0, %s25
      %s39 = sphi 0, %s41
      %s42 = sphi 0, %s39
      %s43 = sphi 0, %s42
      %s59 = sphi 0, %s43
      %s63 = sphi 0, %s63
      %s65 = sphi 0, %s63
      %s66 = sphi 0, %s65
      %s80 = sphi 0, %s66
      %s84 = sphi 0, %s84
      %s86 = sphi 0, %s84
      %s87 = sphi 0, %s86
      %s101 = sphi 0, %s87
      %s105 = sphi 0, %s105
      %s107 = sphi 0, %s105
      %s108 = sphi 0, %s107
      %s122 = sphi 0, %s108
      %s126 = sphi 0, %s126
      %s128 = sphi 0, %s126
      %s129 = sphi 0, %s128
      %s143 = sphi 0, %s129
      %s151 = sphi 0, %s153
      %s154 = sphi 0, %s151
      %s155 = sphi 0, %s154
      %s171 = sphi 0, %s155
    $region4: #{tpu_custom_call.1} parent=1 // loop_header_branch
      %18 = sbr.rel (%p16) target = $region8
    $region5: #{tpu_custom_call.1} parent=1 // loop_body
      %s20 = ssub.s32 %s15, 1
      %s21 = ssub.s32 %s15, 2
      %s28 = sadd.s32 1, %s23
      %p29 = scmp.ge.s32.totalorder %s28, 1
      %s30 = scalar_select %p29, 0, %s28
      %s31 = sadd.s32 1, %s22
      %s32 = scalar_select %p29, %s31, %s22
      %p33 = scmp.ge.s32.totalorder %s32, 2
      %s34 = scalar_select %p33, 0, %s32
      %s35 = ssub.s32 %s22, %s34
      %s36 = ssub.s32 %s23, %s30
      %s37 = sor.u32 %s35, %s36
      %p38 = scmp.eq.s32.totalorder %s37, 0
      %s40 = sadd.s32 %s39, 1
      %s41 = scalar_select %p38, %s39, %s40
      %p44 = pneg %p38
      %p45 = scmp.eq.s32.totalorder %s15, 1
      %p46 = por %p44, %p45
      %p47 = scmp.ne.s32.totalorder %s39, %s42
      %p48 = scmp.eq.s32.totalorder %s15, 0
      %p49 = por %p47, %p48
      %p50 = scmp.ne.s32.totalorder %s39, %s42
      %p51 = scmp.eq.s32.totalorder %s20, 1
      %p52 = por %p50, %p51
      %p53 = scmp.ne.s32.totalorder %s42, %s43
      %p54 = scmp.eq.s32.totalorder %s20, 0
      %p55 = por %p53, %p54
      %p56 = scmp.ne.s32.totalorder %s42, %s43
      %p57 = scmp.eq.s32.totalorder %s21, 1
      %p58 = por %p56, %p57
      %p60 = scmp.ne.s32.totalorder %s43, %s59
      %p61 = scmp.eq.s32.totalorder %s21, 0
      %p62 = por %p60, %p61
      %s64 = sadd.s32 %s63, 1
      %p67 = scmp.eq.s32.totalorder %s15, 1
      %p68 = scmp.ne.s32.totalorder %s63, %s65
      %p69 = scmp.eq.s32.totalorder %s15, 0
      %p70 = por %p68, %p69
      %p71 = scmp.ne.s32.totalorder %s63, %s65
      %p72 = scmp.eq.s32.totalorder %s20, 1
      %p73 = por %p71, %p72
      %p74 = scmp.ne.s32.totalorder %s65, %s66
      %p75 = scmp.eq.s32.totalorder %s20, 0
      %p76 = por %p74, %p75
      %p77 = scmp.ne.s32.totalorder %s65, %s66
      %p78 = scmp.eq.s32.totalorder %s21, 1
      %p79 = por %p77, %p78
      %p81 = scmp.ne.s32.totalorder %s66, %s80
      %p82 = scmp.eq.s32.totalorder %s21, 0
      %p83 = por %p81, %p82
      %s85 = sadd.s32 %s84, 1
      %p88 = scmp.eq.s32.totalorder %s15, 1
      %p89 = scmp.ne.s32.totalorder %s84, %s86
      %p90 = scmp.eq.s32.totalorder %s15, 0
      %p91 = por %p89, %p90
      %p92 = scmp.ne.s32.totalorder %s84, %s86
      %p93 = scmp.eq.s32.totalorder %s20, 1
      %p94 = por %p92, %p93
      %p95 = scmp.ne.s32.totalorder %s86, %s87
      %p96 = scmp.eq.s32.totalorder %s20, 0
      %p97 = por %p95, %p96
      %p98 = scmp.ne.s32.totalorder %s86, %s87
      %p99 = scmp.eq.s32.totalorder %s21, 1
      %p100 = por %p98, %p99
      %p102 = scmp.ne.s32.totalorder %s87, %s101
      %p103 = scmp.eq.s32.totalorder %s21, 0
      %p104 = por %p102, %p103
      %s106 = sadd.s32 %s105, 1
      %p109 = scmp.eq.s32.totalorder %s15, 1
      %p110 = scmp.ne.s32.totalorder %s105, %s107
      %p111 = scmp.eq.s32.totalorder %s15, 0
      %p112 = por %p110, %p111
      %p113 = scmp.ne.s32.totalorder %s105, %s107
      %p114 = scmp.eq.s32.totalorder %s20, 1
      %p115 = por %p113, %p114
      %p116 = scmp.ne.s32.totalorder %s107, %s108
      %p117 = scmp.eq.s32.totalorder %s20, 0
      %p118 = por %p116, %p117
      %p119 = scmp.ne.s32.totalorder %s107, %s108
      %p120 = scmp.eq.s32.totalorder %s21, 1
      %p121 = por %p119, %p120
      %p123 = scmp.ne.s32.totalorder %s108, %s122
      %p124 = scmp.eq.s32.totalorder %s21, 0
      %p125 = por %p123, %p124
      %s127 = sadd.s32 %s126, 1
      %p130 = scmp.eq.s32.totalorder %s15, 1
      %p131 = scmp.ne.s32.totalorder %s126, %s128
      %p132 = scmp.eq.s32.totalorder %s15, 0
      %p133 = por %p131, %p132
      %p134 = scmp.ne.s32.totalorder %s126, %s128
      %p135 = scmp.eq.s32.totalorder %s20, 1
      %p136 = por %p134, %p135
      %p137 = scmp.ne.s32.totalorder %s128, %s129
      %p138 = scmp.eq.s32.totalorder %s20, 0
      %p139 = por %p137, %p138
      %p140 = scmp.ne.s32.totalorder %s128, %s129
      %p141 = scmp.eq.s32.totalorder %s21, 1
      %p142 = por %p140, %p141
      %p144 = scmp.ne.s32.totalorder %s129, %s143
      %p145 = scmp.eq.s32.totalorder %s21, 0
      %p146 = por %p144, %p145
      %s147 = ssub.s32 %s22, %s34
      %s148 = ssub.s32 %s23, %s30
      %s149 = sor.u32 %s147, %s148
      %p150 = scmp.eq.s32.totalorder %s149, 0
      %s152 = sadd.s32 %s151, 1
      %s153 = scalar_select %p150, %s151, %s152
      %p156 = pneg %p150
      %p157 = scmp.eq.s32.totalorder %s15, 1
      %p158 = por %p156, %p157
      %p159 = scmp.ne.s32.totalorder %s151, %s154
      %p160 = scmp.eq.s32.totalorder %s15, 0
      %p161 = por %p159, %p160
      %p162 = scmp.ne.s32.totalorder %s151, %s154
      %p163 = scmp.eq.s32.totalorder %s20, 1
      %p164 = por %p162, %p163
      %p165 = scmp.ne.s32.totalorder %s154, %s155
      %p166 = scmp.eq.s32.totalorder %s20, 0
      %p167 = por %p165, %p166
      %p168 = scmp.ne.s32.totalorder %s154, %s155
      %p169 = scmp.eq.s32.totalorder %s21, 1
      %p170 = por %p168, %p169
      %p172 = scmp.ne.s32.totalorder %s155, %s171
      %p173 = scmp.eq.s32.totalorder %s21, 0
      %p174 = por %p172, %p173
      %p175 = scmp.le.s32.totalorder 1, %s15
      %p176 = scmp.lt.s32.totalorder %s15, 3
      %p177 = pnand %p175, %p176
      %p178 = pneg %p177
      // Predicated region
      $region9: #{tpu_custom_call.1} parent=5 // pred_check
        _
      $region10: #{tpu_custom_call.1} parent=5 // pred_check_branch
        %180 = sbr.rel (%p177) target = $region12
      $region11: #{tpu_custom_call.1} parent=5 // pred_region
        %s181 = ssub.s32 %s15, 1
        // Predicated region
        $region13: #{tpu_custom_call.1} parent=11 // pred_check
          %p182 = pneg %p76
        $region14: #{tpu_custom_call.1} parent=11 // pred_check_branch
          %184 = sbr.rel (%p182) target = $region16
        $region15: #{tpu_custom_call.1} parent=11 // pred_region
          _
        $region16: #{tpu_custom_call.1} parent=11 // pred_fallthru
          _
        // Predicated region
        $region17: #{tpu_custom_call.1} parent=11 // pred_check
          %p185 = pneg %p97
        $region18: #{tpu_custom_call.1} parent=11 // pred_check_branch
          %187 = sbr.rel (%p185) target = $region20
        $region19: #{tpu_custom_call.1} parent=11 // pred_region
          _
        $region20: #{tpu_custom_call.1} parent=11 // pred_fallthru
          _
        // Predicated region
        $region21: #{tpu_custom_call.1} parent=11 // pred_check
          %p188 = pneg %p118
        $region22: #{tpu_custom_call.1} parent=11 // pred_check_branch
          %190 = sbr.rel (%p188) target = $region24
        $region23: #{tpu_custom_call.1} parent=11 // pred_region
          _
        $region24: #{tpu_custom_call.1} parent=11 // pred_fallthru
          _
        // Predicated region
        $region25: #{tpu_custom_call.1} parent=11 // pred_check
          %p191 = pneg %p139
        $region26: #{tpu_custom_call.1} parent=11 // pred_check_branch
          %193 = sbr.rel (%p191) target = $region28
        $region27: #{tpu_custom_call.1} parent=11 // pred_region
          %s195 = ssub.s32 16, 16
          %196 = vsyncadd [#allocation4], %s195
          %s198 = sshll.u32 %s4, 4
          %s199 = int_to_ptr.vmem [resolvable:$true] %s198
          %201 = dma.vmem_to_smem %s199, 16, [#allocation2], [#allocation4]
        $region28: #{tpu_custom_call.1} parent=11 // pred_fallthru
          _
      $region12: #{tpu_custom_call.1} parent=5 // pred_fallthru
        _
      %p202 = scmp.lt.s32.totalorder %s15, 2
      // Predicated region
      $region29: #{tpu_custom_call.1} parent=5 // pred_check
        %p203 = pneg %p202
      $region30: #{tpu_custom_call.1} parent=5 // pred_check_branch
        %205 = sbr.rel (%p203) target = $region32
      $region31: #{tpu_custom_call.1} parent=5 // pred_region
        // Predicated region
        $region33: #{tpu_custom_call.1} parent=31 // pred_check
          %p206 = pneg %p49
        $region34: #{tpu_custom_call.1} parent=31 // pred_check_branch
          %208 = sbr.rel (%p206) target = $region36
        $region35: #{tpu_custom_call.1} parent=31 // pred_region
          %s209 = smul.u32 2, %s23
          %p210 = scmp.lt.s32.totalorder %s22, 1
          %s211 = scalar_select %p210, %s22, 1
          %p212 = scmp.lt.s32.totalorder %s209, 1
          %s213 = scalar_select %p212, %s209, 1
          %s214 = smul.addr %s211, 56
          %s215 = sadd.s32 %s213, %s214
          %s216 = smul.addr %s215, 4
          %s217 = scalar_lea.vmem %s0, %s216
          %s218 = smul.u32 2, %s23
        $region36: #{tpu_custom_call.1} parent=31 // pred_fallthru
          _
      $region32: #{tpu_custom_call.1} parent=5 // pred_fallthru
        _
      %p219 = scmp.le.s32.totalorder 1, %s15
      %p220 = scmp.lt.s32.totalorder %s15, 3
      %p221 = pnand %p219, %p220
      %p222 = pneg %p221
      // Predicated region
      $region37: #{tpu_custom_call.1} parent=5 // pred_check
        _
      $region38: #{tpu_custom_call.1} parent=5 // pred_check_branch
        %224 = sbr.rel (%p221) target = $region40
      $region39: #{tpu_custom_call.1} parent=5 // pred_region
        %s225 = ssub.s32 %s15, 1
        // Predicated region
        $region41: #{tpu_custom_call.1} parent=39 // pred_check
          %p226 = pneg %p139
        $region42: #{tpu_custom_call.1} parent=39 // pred_check_branch
          %228 = sbr.rel (%p226) target = $region44
        $region43: #{tpu_custom_call.1} parent=39 // pred_region
          %229 = dma.done [#allocation4], 16
        $region44: #{tpu_custom_call.1} parent=39 // pred_fallthru
          _
        %230 = sfence
        %s231 = smul.u32 2, %s25
        %p232 = scmp.lt.s32.totalorder %s24, 1
        %s233 = scalar_select %p232, %s24, 1
        %p234 = scmp.lt.s32.totalorder %s231, 1
        %s235 = scalar_select %p234, %s231, 1
        %s236 = smul.addr %s233, 56
        %s237 = sadd.s32 %s235, %s236
        %s238 = smul.addr %s237, 4
        %s239 = scalar_lea.vmem %s0, %s238
        %p240 = pneg %p55
        %p241 = pneg %p52
        %p242 = pneg %p76
        %p243 = pneg %p73
        %p244 = pneg %p97
        %p245 = pneg %p94
        %p246 = pneg %p118
        %p247 = pneg %p115
        %p248 = pneg %p139
        %p249 = pneg %p136
        %p250 = pneg %p167
        %p251 = pneg %p164
        %s252 = sand.u32 %s154, 1
        %s253 = scalar_lea.sflag [#allocation3], %s252
        %s254 = sand.u32 %s154, 1
        %s255 = smul.addr %s254, 4
        %s256 = scalar_lea.vmem [#allocation5], %s255
        %s257 = smul.u32 2, %s25
        %p258 = scmp.lt.s32.totalorder %s24, 1
        %s259 = scalar_select %p258, %s24, 1
        %p260 = scmp.lt.s32.totalorder %s257, 1
        %s261 = scalar_select %p260, %s257, 1
        %s262 = smul.addr %s259, 56
        %s263 = sadd.s32 %s261, %s262
        %s264 = smul.addr %s263, 4
        %s265 = scalar_lea.vmem %s0, %s264
        %s266 = smul.u32 2, %s25
        %s267 = smul.u32 2, %s25
        %v269 = vld [vmem:[%s265] sm:$0xff]
        %v270 = vld [vmem:[%s265 + $0x8] sm:$0xff]
        %v271 = vld [vmem:[%s265 + $0x10] sm:$0xff]
        %v272 = vld [vmem:[%s265 + $0x18] sm:$0xff]
        %v273 = vld [vmem:[%s265 + $0x20] sm:$0xff]
        %v274 = vld [vmem:[%s265 + $0x28] sm:$0xff]
        %v275 = vld [vmem:[%s265 + $0x30] sm:$0xff]
        %v276 = vld [vmem:[%s265 + $0x38] sm:$0xff]
        %v277 = vld [vmem:[%s265 + $0x40] sm:$0xff]
        %v278 = vld [vmem:[%s265 + $0x48] sm:$0xff]
        %v279 = vld [vmem:[%s265 + $0x50] sm:$0xff]
        %v280 = vld [vmem:[%s265 + $0x58] sm:$0xff]
        %v281 = vld [vmem:[%s265 + $0x60] sm:$0xff]
        %v282 = vld [vmem:[%s265 + $0x68] sm:$0xff]
        %v283 = vld [vmem:[%s1] sm:$0xf]
        %v284 = vld [vmem:[%s1 + $0x4] sm:$0xf]
        %v285 = vld [vmem:[%s1 + $0x8] sm:$0xf]
        %v286 = vld [vmem:[%s1 + $0xc] sm:$0xf]
        %v287 = vld [vmem:[%s1 + $0x10] sm:$0xf]
        %v288 = vld [vmem:[%s1 + $0x14] sm:$0xf]
        %v289 = vld [vmem:[%s1 + $0x18] sm:$0xf]
        %v290 = vld [vmem:[%s1 + $0x1c] sm:$0xf]
        %v291 = vld [vmem:[%s1 + $0x20] sm:$0xf]
        %v292 = vld [vmem:[%s1 + $0x24] sm:$0xf]
        %v293 = vld [vmem:[%s1 + $0x28] sm:$0xf]
        %v294 = vld [vmem:[%s1 + $0x2c] sm:$0xf]
        %v295 = vld [vmem:[%s1 + $0x30] sm:$0xf]
        %v296 = vld [vmem:[%s1 + $0x34] sm:$0xf]
        %v297 = vld [vmem:[%s1 + $0x38] sm:$0xf]
        %v298 = vld [vmem:[%s1 + $0x3c] sm:$0xf]
        %v299 = vld [vmem:[%s2] sm:$0xff]
        %v300 = vld [vmem:[%s2 + $0x8] sm:$0xff]
        %v301 = vld [vmem:[%s2 + $0x10] sm:$0xff]
        %v302 = vld [vmem:[%s2 + $0x18] sm:$0xff]
        %v303 = vld [vmem:[%s2 + $0x20] sm:$0xff]
        %v304 = vld [vmem:[%s2 + $0x28] sm:$0xff]
        %v305 = vld [vmem:[%s2 + $0x30] sm:$0xff]
        %v306 = vld [vmem:[%s2 + $0x38] sm:$0xff]
        %v307 = vld [vmem:[%s2 + $0x40] sm:$0xff]
        %v308 = vld [vmem:[%s2 + $0x48] sm:$0xff]
        %v309 = vld [vmem:[%s2 + $0x50] sm:$0xff]
        %v310 = vld [vmem:[%s2 + $0x58] sm:$0xff]
        %v311 = vld [vmem:[%s2 + $0x60] sm:$0xff]
        %v312 = vld [vmem:[%s2 + $0x68] sm:$0xff]
        %v313 = vld [vmem:[%s2 + $0x70] sm:$0xff]
        %v314 = vld [vmem:[%s2 + $0x78] sm:$0xff]
        %316 = vset.pattern.permute.xlu0 0
        %317 = vperm.xlu0 %316, %v299
        %v318 = vpop.permute.xlu0 %317
        %321 = vset.pattern.permute.xlu0 0
        %322 = vperm.xlu0 %321, %v300
        %v323 = vpop.permute.xlu0 %322
        %326 = vset.pattern.permute.xlu0 0
        %327 = vperm.xlu0 %326, %v301
        %v328 = vpop.permute.xlu0 %327
        %331 = vset.pattern.permute.xlu0 0
        %332 = vperm.xlu0 %331, %v302
        %v333 = vpop.permute.xlu0 %332
        %336 = vset.pattern.permute.xlu0 0
        %337 = vperm.xlu0 %336, %v303
        %v338 = vpop.permute.xlu0 %337
        %341 = vset.pattern.permute.xlu0 0
        %342 = vperm.xlu0 %341, %v304
        %v343 = vpop.permute.xlu0 %342
        %346 = vset.pattern.permute.xlu0 0
        %347 = vperm.xlu0 %346, %v305
        %v348 = vpop.permute.xlu0 %347
        %351 = vset.pattern.permute.xlu0 0
        %352 = vperm.xlu0 %351, %v306
        %v353 = vpop.permute.xlu0 %352
        %356 = vset.pattern.permute.xlu0 0
        %357 = vperm.xlu0 %356, %v307
        %v358 = vpop.permute.xlu0 %357
        %361 = vset.pattern.permute.xlu0 0
        %362 = vperm.xlu0 %361, %v308
        %v363 = vpop.permute.xlu0 %362
        %366 = vset.pattern.permute.xlu0 0
        %367 = vperm.xlu0 %366, %v309
        %v368 = vpop.permute.xlu0 %367
        %371 = vset.pattern.permute.xlu0 0
        %372 = vperm.xlu0 %371, %v310
        %v373 = vpop.permute.xlu0 %372
        %376 = vset.pattern.permute.xlu0 0
        %377 = vperm.xlu0 %376, %v311
        %v378 = vpop.permute.xlu0 %377
        %381 = vset.pattern.permute.xlu0 0
        %382 = vperm.xlu0 %381, %v312
        %v383 = vpop.permute.xlu0 %382
        %386 = vset.pattern.permute.xlu0 0
        %387 = vperm.xlu0 %386, %v313
        %v388 = vpop.permute.xlu0 %387
        %391 = vset.pattern.permute.xlu0 0
        %392 = vperm.xlu0 %391, %v314
        %v393 = vpop.permute.xlu0 %392
        %v411 = vunpack.c.l.b16 %v283
        %v412 = vunpack.c.l.b16 %v284
        %v413 = vunpack.c.l.b16 %v285
        %v414 = vunpack.c.l.b16 %v286
        %v415 = vunpack.c.l.b16 %v287
        %v416 = vunpack.c.l.b16 %v288
        %v417 = vunpack.c.l.b16 %v289
        %v418 = vunpack.c.l.b16 %v290
        %v419 = vunpack.c.l.b16 %v291
        %v420 = vunpack.c.l.b16 %v292
        %v421 = vunpack.c.l.b16 %v293
        %v422 = vunpack.c.l.b16 %v294
        %v423 = vunpack.c.l.b16 %v295
        %v424 = vunpack.c.l.b16 %v296
        %v425 = vunpack.c.l.b16 %v297
        %v426 = vunpack.c.l.b16 %v298
        %v427 = vpack.c.b16 %v412, %v411
        %v428 = vpack.c.b16 %v414, %v413
        %v429 = vpack.c.b16 %v416, %v415
        %v430 = vpack.c.b16 %v418, %v417
        %v431 = vpack.c.b16 %v420, %v419
        %v432 = vpack.c.b16 %v422, %v421
        %v433 = vpack.c.b16 %v424, %v423
        %v434 = vpack.c.b16 %v426, %v425
        %v449 = vunpack.c.l.b16 %v269
        %v450 = vunpack.c.h.b16 %v269
        %v451 = vunpack.c.l.b16 %v270
        %v452 = vunpack.c.h.b16 %v270
        %v453 = vunpack.c.l.b16 %v271
        %v454 = vunpack.c.h.b16 %v271
        %v455 = vunpack.c.l.b16 %v272
        %v456 = vunpack.c.h.b16 %v272
        %v457 = vunpack.c.l.b16 %v273
        %v458 = vunpack.c.h.b16 %v273
        %v459 = vunpack.c.l.b16 %v274
        %v460 = vunpack.c.h.b16 %v274
        %v461 = vunpack.c.l.b16 %v275
        %v462 = vunpack.c.h.b16 %v275
        %v463 = vunpack.c.l.b16 %v276
        %v464 = vunpack.c.h.b16 %v276
        %v465 = vunpack.c.l.b16 %v277
        %v466 = vunpack.c.h.b16 %v277
        %v467 = vunpack.c.l.b16 %v278
        %v468 = vunpack.c.h.b16 %v278
        %v469 = vunpack.c.l.b16 %v279
        %v470 = vunpack.c.h.b16 %v279
        %v471 = vunpack.c.l.b16 %v280
        %v472 = vunpack.c.h.b16 %v280
        %v473 = vunpack.c.l.b16 %v281
        %v474 = vunpack.c.h.b16 %v281
        %v475 = vunpack.c.l.b16 %v282
        %v476 = vunpack.c.h.b16 %v282
        %v477 = vpack.c.b16 %v451, %v449
        %v478 = vpack.c.b16 %v452, %v450
        %v479 = vpack.c.b16 %v455, %v453
        %v480 = vpack.c.b16 %v456, %v454
        %v481 = vpack.c.b16 %v459, %v457
        %v482 = vpack.c.b16 %v460, %v458
        %v483 = vpack.c.b16 %v463, %v461
        %v484 = vpack.c.b16 %v464, %v462
        %v485 = vpack.c.b16 %v467, %v465
        %v486 = vpack.c.b16 %v468, %v466
        %v487 = vpack.c.b16 %v471, %v469
        %v488 = vpack.c.b16 %v472, %v470
        %v489 = vpack.c.b16 %v475, %v473
        %v490 = vpack.c.b16 %v476, %v474
        %vm505 = vcmask 916480
        %v507 = vsel %vm505, %v427, 0
        %v510 = vsel %vm505, %v428, 0
        %v513 = vsel %vm505, %v429, 0
        %v516 = vsel %vm505, %v430, 0
        %v519 = vsel %vm505, %v431, 0
        %v522 = vsel %vm505, %v432, 0
        %v525 = vsel %vm505, %v433, 0
        %v528 = vsel %vm505, %v434, 0
        %530 = vmatprep.subr.bf16.mxu0 %v478
        %531 = vmatpush1.bf16.msra.mxu0 %v477
        %532 = vmatprep.subr.bf16.mxu0 %v480
        %533 = vmatpush1.bf16.msra.mxu0 %v479
        %534 = vmatprep.subr.bf16.mxu0 %v482
        %535 = vmatpush1.bf16.msra.mxu0 %v481
        %536 = vmatprep.subr.bf16.mxu0 %v484
        %537 = vmatpush1.bf16.msra.mxu0 %v483
        %538 = vmatprep.subr.bf16.mxu0 %v486
        %539 = vmatpush1.bf16.msra.mxu0 %v485
        %540 = vmatprep.subr.bf16.mxu0 %v488
        %541 = vmatpush1.bf16.msra.mxu0 %v487
        %542 = vmatprep.subr.bf16.mxu0 %v490
        %543 = vmatpush1.bf16.msra.mxu0 %v489
        %544 = vmatprep.subr.bf16.mxu0 0
        %545 = vmatpush1.bf16.msra.mxu0 0
        %546 = vmatprep.subr.bf16.mxu0 0
        %547 = vmatpush1.bf16.msra.mxu0 0
        %548 = vmatprep.subr.bf16.mxu0 0
        %549 = vmatpush1.bf16.msra.mxu0 0
        %550 = vmatprep.subr.bf16.mxu0 0
        %551 = vmatpush1.bf16.msra.mxu0 0
        %552 = vmatprep.subr.bf16.mxu0 0
        %553 = vmatpush1.bf16.msra.mxu0 0
        %554 = vmatprep.subr.bf16.mxu0 0
        %555 = vmatpush1.bf16.msra.mxu0 0
        %556 = vmatprep.subr.bf16.mxu0 0
        %557 = vmatpush1.bf16.msra.mxu0 0
        %558 = vmatprep.subr.bf16.mxu0 0
        %559 = vmatpush1.bf16.msra.mxu0 0
        %560 = vmatprep.subr.bf16.mxu0 0
        %561 = vmatpush1.bf16.msra.mxu0 0
        %562 = vmatprep.mubr.bf16.mxu0 0
        %563 = vmatmul.mubr.bf16.gmra.mrb[0].mxu0 %v507
        %v564 = vpop.f32.mrb[0].mxu0
        %v565 = vadd.f32 %v318, %v564
        %v566 = vpop.f32.mrb[0].mxu0
        %v567 = vadd.f32 %v318, %v566
        %v568 = vpop.f32.mrb[0].mxu0
        %v569 = vadd.f32 %v323, %v568
        %v570 = vpop.f32.mrb[0].mxu0
        %v571 = vadd.f32 %v323, %v570
        %572 = vmatprep.mubr.bf16.mxu0 0
        %573 = vmatmul.mubr.bf16.gmra.mrb[0].mxu0 %v510
        %v574 = vpop.f32.mrb[0].mxu0
        %v575 = vadd.f32 %v328, %v574
        %v576 = vpop.f32.mrb[0].mxu0
        %v577 = vadd.f32 %v328, %v576
        %v578 = vpop.f32.mrb[0].mxu0
        %v579 = vadd.f32 %v333, %v578
        %v580 = vpop.f32.mrb[0].mxu0
        %v581 = vadd.f32 %v333, %v580
        %582 = vmatprep.mubr.bf16.mxu0 0
        %583 = vmatmul.mubr.bf16.gmra.mrb[0].mxu0 %v513
        %v584 = vpop.f32.mrb[0].mxu0
        %v585 = vadd.f32 %v338, %v584
        %v586 = vpop.f32.mrb[0].mxu0
        %v587 = vadd.f32 %v338, %v586
        %v588 = vpop.f32.mrb[0].mxu0
        %v589 = vadd.f32 %v343, %v588
        %v590 = vpop.f32.mrb[0].mxu0
        %v591 = vadd.f32 %v343, %v590
        %592 = vmatprep.mubr.bf16.mxu0 0
        %593 = vmatmul.mubr.bf16.gmra.mrb[0].mxu0 %v516
        %v594 = vpop.f32.mrb[0].mxu0
        %v595 = vadd.f32 %v348, %v594
        %v596 = vpop.f32.mrb[0].mxu0
        %v597 = vadd.f32 %v348, %v596
        %v598 = vpop.f32.mrb[0].mxu0
        %v599 = vadd.f32 %v353, %v598
        %v600 = vpop.f32.mrb[0].mxu0
        %v601 = vadd.f32 %v353, %v600
        %602 = vmatprep.mubr.bf16.mxu0 0
        %603 = vmatmul.mubr.bf16.gmra.mrb[0].mxu0 %v519
        %v604 = vpop.f32.mrb[0].mxu0
        %v605 = vadd.f32 %v358, %v604
        %v606 = vpop.f32.mrb[0].mxu0
        %v607 = vadd.f32 %v358, %v606
        %v608 = vpop.f32.mrb[0].mxu0
        %v609 = vadd.f32 %v363, %v608
        %v610 = vpop.f32.mrb[0].mxu0
        %v611 = vadd.f32 %v363, %v610
        %612 = vmatprep.mubr.bf16.mxu0 0
        %613 = vmatmul.mubr.bf16.gmra.mrb[0].mxu0 %v522
        %v614 = vpop.f32.mrb[0].mxu0
        %v615 = vadd.f32 %v368, %v614
        %v616 = vpop.f32.mrb[0].mxu0
        %v617 = vadd.f32 %v368, %v616
        %v618 = vpop.f32.mrb[0].mxu0
        %v619 = vadd.f32 %v373, %v618
        %v620 = vpop.f32.mrb[0].mxu0
        %v621 = vadd.f32 %v373, %v620
        %622 = vmatprep.mubr.bf16.mxu0 0
        %623 = vmatmul.mubr.bf16.gmra.mrb[0].mxu0 %v525
        %v624 = vpop.f32.mrb[0].mxu0
        %v625 = vadd.f32 %v378, %v624
        %v626 = vpop.f32.mrb[0].mxu0
        %v627 = vadd.f32 %v378, %v626
        %v628 = vpop.f32.mrb[0].mxu0
        %v629 = vadd.f32 %v383, %v628
        %v630 = vpop.f32.mrb[0].mxu0
        %v631 = vadd.f32 %v383, %v630
        %632 = vmatprep.mubr.bf16.mxu0 0
        %633 = vmatmul.mubr.bf16.gmra.mrb[0].mxu0 %v528
        %v634 = vpop.f32.mrb[0].mxu0
        %v635 = vadd.f32 %v388, %v634
        %v636 = vpop.f32.mrb[0].mxu0
        %v637 = vadd.f32 %v388, %v636
        %v638 = vpop.f32.mrb[0].mxu0
        %v639 = vadd.f32 %v393, %v638
        %v640 = vpop.f32.mrb[0].mxu0
        %v641 = vadd.f32 %v393, %v640
        %642 = vdwg.mxu0
        %vm643 = vcmp.ge.f32.partialorder %v565, 0.0
        %vm644 = vcmp.ge.f32.partialorder %v567, 0.0
        %vm645 = vcmp.ge.f32.partialorder %v569, 0.0
        %vm646 = vcmp.ge.f32.partialorder %v571, 0.0
        %vm647 = vcmp.ge.f32.partialorder %v575, 0.0
        %vm648 = vcmp.ge.f32.partialorder %v577, 0.0
        %vm649 = vcmp.ge.f32.partialorder %v579, 0.0
        %vm650 = vcmp.ge.f32.partialorder %v581, 0.0
        %vm651 = vcmp.ge.f32.partialorder %v585, 0.0
        %vm652 = vcmp.ge.f32.partialorder %v587, 0.0
        %vm653 = vcmp.ge.f32.partialorder %v589, 0.0
        %vm654 = vcmp.ge.f32.partialorder %v591, 0.0
        %vm655 = vcmp.ge.f32.partialorder %v595, 0.0
        %vm656 = vcmp.ge.f32.partialorder %v597, 0.0
        %vm657 = vcmp.ge.f32.partialorder %v599, 0.0
        %vm658 = vcmp.ge.f32.partialorder %v601, 0.0
        %vm659 = vcmp.ge.f32.partialorder %v605, 0.0
        %vm660 = vcmp.ge.f32.partialorder %v607, 0.0
        %vm661 = vcmp.ge.f32.partialorder %v609, 0.0
        %vm662 = vcmp.ge.f32.partialorder %v611, 0.0
        %vm663 = vcmp.ge.f32.partialorder %v615, 0.0
        %vm664 = vcmp.ge.f32.partialorder %v617, 0.0
        %vm665 = vcmp.ge.f32.partialorder %v619, 0.0
        %vm666 = vcmp.ge.f32.partialorder %v621, 0.0
        %vm667 = vcmp.ge.f32.partialorder %v625, 0.0
        %vm668 = vcmp.ge.f32.partialorder %v627, 0.0
        %vm669 = vcmp.ge.f32.partialorder %v629, 0.0
        %vm670 = vcmp.ge.f32.partialorder %v631, 0.0
        %vm671 = vcmp.ge.f32.partialorder %v635, 0.0
        %vm672 = vcmp.ge.f32.partialorder %v637, 0.0
        %vm673 = vcmp.ge.f32.partialorder %v639, 0.0
        %vm674 = vcmp.ge.f32.partialorder %v641, 0.0
        %v675 = vmul.f32 %v565, 0.1
        %v676 = vmul.f32 %v567, 0.1
        %v677 = vmul.f32 %v569, 0.1
        %v678 = vmul.f32 %v571, 0.1
        %v679 = vmul.f32 %v575, 0.1
        %v680 = vmul.f32 %v577, 0.1
        %v681 = vmul.f32 %v579, 0.1
        %v682 = vmul.f32 %v581, 0.1
        %v683 = vmul.f32 %v585, 0.1
        %v684 = vmul.f32 %v587, 0.1
        %v685 = vmul.f32 %v589, 0.1
        %v686 = vmul.f32 %v591, 0.1
        %v687 = vmul.f32 %v595, 0.1
        %v688 = vmul.f32 %v597, 0.1
        %v689 = vmul.f32 %v599, 0.1
        %v690 = vmul.f32 %v601, 0.1
        %v691 = vmul.f32 %v605, 0.1
        %v692 = vmul.f32 %v607, 0.1
        %v693 = vmul.f32 %v609, 0.1
        %v694 = vmul.f32 %v611, 0.1
        %v695 = vmul.f32 %v615, 0.1
        %v696 = vmul.f32 %v617, 0.1
        %v697 = vmul.f32 %v619, 0.1
        %v698 = vmul.f32 %v621, 0.1
        %v699 = vmul.f32 %v625, 0.1
        %v700 = vmul.f32 %v627, 0.1
        %v701 = vmul.f32 %v629, 0.1
        %v702 = vmul.f32 %v631, 0.1
        %v703 = vmul.f32 %v635, 0.1
        %v704 = vmul.f32 %v637, 0.1
        %v705 = vmul.f32 %v639, 0.1
        %v706 = vmul.f32 %v641, 0.1
        %v707 = vsel %vm643, %v565, %v675
        %v708 = vsel %vm644, %v567, %v676
        %v709 = vsel %vm645, %v569, %v677
        %v710 = vsel %vm646, %v571, %v678
        %v711 = vsel %vm647, %v575, %v679
        %v712 = vsel %vm648, %v577, %v680
        %v713 = vsel %vm649, %v579, %v681
        %v714 = vsel %vm650, %v581, %v682
        %v715 = vsel %vm651, %v585, %v683
        %v716 = vsel %vm652, %v587, %v684
        %v717 = vsel %vm653, %v589, %v685
        %v718 = vsel %vm654, %v591, %v686
        %v719 = vsel %vm655, %v595, %v687
        %v720 = vsel %vm656, %v597, %v688
        %v721 = vsel %vm657, %v599, %v689
        %v722 = vsel %vm658, %v601, %v690
        %v723 = vsel %vm659, %v605, %v691
        %v724 = vsel %vm660, %v607, %v692
        %v725 = vsel %vm661, %v609, %v693
        %v726 = vsel %vm662, %v611, %v694
        %v727 = vsel %vm663, %v615, %v695
        %v728 = vsel %vm664, %v617, %v696
        %v729 = vsel %vm665, %v619, %v697
        %v730 = vsel %vm666, %v621, %v698
        %v731 = vsel %vm667, %v625, %v699
        %v732 = vsel %vm668, %v627, %v700
        %v733 = vsel %vm669, %v629, %v701
        %v734 = vsel %vm670, %v631, %v702
        %v735 = vsel %vm671, %v635, %v703
        %v736 = vsel %vm672, %v637, %v704
        %v737 = vsel %vm673, %v639, %v705
        %v738 = vsel %vm674, %v641, %v706
        %v739 = vsub.f32 %v707, 0.4
        %v740 = vsub.f32 %v708, 0.4
        %v741 = vsub.f32 %v709, 0.4
        %v742 = vsub.f32 %v710, 0.4
        %v743 = vsub.f32 %v711, 0.4
        %v744 = vsub.f32 %v712, 0.4
        %v745 = vsub.f32 %v713, 0.4
        %v746 = vsub.f32 %v714, 0.4
        %v747 = vsub.f32 %v715, 0.4
        %v748 = vsub.f32 %v716, 0.4
        %v749 = vsub.f32 %v717, 0.4
        %v750 = vsub.f32 %v718, 0.4
        %v751 = vsub.f32 %v719, 0.4
        %v752 = vsub.f32 %v720, 0.4
        %v753 = vsub.f32 %v721, 0.4
        %v754 = vsub.f32 %v722, 0.4
        %v755 = vsub.f32 %v723, 0.4
        %v756 = vsub.f32 %v724, 0.4
        %v757 = vsub.f32 %v725, 0.4
        %v758 = vsub.f32 %v726, 0.4
        %v759 = vsub.f32 %v727, 0.4
        %v760 = vsub.f32 %v728, 0.4
        %v761 = vsub.f32 %v729, 0.4
        %v762 = vsub.f32 %v730, 0.4
        %v763 = vsub.f32 %v731, 0.4
        %v764 = vsub.f32 %v732, 0.4
        %v765 = vsub.f32 %v733, 0.4
        %v766 = vsub.f32 %v734, 0.4
        %v767 = vsub.f32 %v735, 0.4
        %v768 = vsub.f32 %v736, 0.4
        %v769 = vsub.f32 %v737, 0.4
        %v770 = vsub.f32 %v738, 0.4
        %v771 = vld [vmem:[%s3] sm:$0x1]
        %s772 = sld [smem:[#allocation2]]
        %v773 = vstv %s772
        %774 = vmatprep.subr.mxu0 %v740
        %775 = vmatpush1.msra.mxu0 %v739
        %776 = vmatprep.subr.mxu0 %v742
        %777 = vmatpush1.msra.mxu0 %v741
        %778 = vmatprep.subr.mxu0 %v744
        %779 = vmatpush1.msra.mxu0 %v743
        %780 = vmatprep.subr.mxu0 %v746
        %781 = vmatpush1.msra.mxu0 %v745
        %782 = vmatprep.subr.mxu0 %v748
        %783 = vmatpush1.msra.mxu0 %v747
        %784 = vmatprep.subr.mxu0 %v750
        %785 = vmatpush1.msra.mxu0 %v749
        %786 = vmatprep.subr.mxu0 %v752
        %787 = vmatpush1.msra.mxu0 %v751
        %788 = vmatprep.subr.mxu0 %v754
        %789 = vmatpush1.msra.mxu0 %v753
        %790 = vmatprep.subr.mxu0 %v756
        %791 = vmatpush1.msra.mxu0 %v755
        %792 = vmatprep.subr.mxu0 %v758
        %793 = vmatpush1.msra.mxu0 %v757
        %794 = vmatprep.subr.mxu0 %v760
        %795 = vmatpush1.msra.mxu0 %v759
        %796 = vmatprep.subr.mxu0 %v762
        %797 = vmatpush1.msra.mxu0 %v761
        %798 = vmatprep.subr.mxu0 %v764
        %799 = vmatpush1.msra.mxu0 %v763
        %800 = vmatprep.subr.mxu0 %v766
        %801 = vmatpush1.msra.mxu0 %v765
        %802 = vmatprep.subr.mxu0 %v768
        %803 = vmatpush1.msra.mxu0 %v767
        %804 = vmatprep.subr.mxu0 %v770
        %805 = vmatpush1.msra.mxu0 %v769
        %806 = vmatprep.subr.mxu0 0.0
        %807 = vmatpush1.msra.mxu0 0.0
        %808 = vmatprep.subr.mxu0 0.0
        %809 = vmatpush1.msra.mxu0 0.0
        %810 = vmatprep.subr.mxu0 0.0
        %811 = vmatpush1.msra.mxu0 0.0
        %812 = vmatprep.subr.mxu0 0.0
        %813 = vmatpush1.msra.mxu0 0.0
        %814 = vmatprep.subr.mxu0 0.0
        %815 = vmatpush1.msra.mxu0 0.0
        %816 = vmatprep.subr.mxu0 0.0
        %817 = vmatpush1.msra.mxu0 0.0
        %818 = vmatprep.subr.mxu0 0.0
        %819 = vmatpush1.msra.mxu0 0.0
        %820 = vmatprep.subr.mxu0 0.0
        %821 = vmatpush1.msra.mxu0 0.0
        %822 = vmatprep.subr.mxu0 0.0
        %823 = vmatpush1.msra.mxu0 0.0
        %824 = vmatprep.subr.mxu0 0.0
        %825 = vmatpush1.msra.mxu0 0.0
        %826 = vmatprep.subr.mxu0 0.0
        %827 = vmatpush1.msra.mxu0 0.0
        %828 = vmatprep.subr.mxu0 0.0
        %829 = vmatpush1.msra.mxu0 0.0
        %830 = vmatprep.subr.mxu0 0.0
        %831 = vmatpush1.msra.mxu0 0.0
        %832 = vmatprep.subr.mxu0 0.0
        %833 = vmatpush1.msra.mxu0 0.0
        %834 = vmatprep.subr.mxu0 0.0
        %835 = vmatpush1.msra.mxu0 0.0
        %836 = vmatprep.subr.mxu0 0.0
        %837 = vmatpush1.msra.mxu0 0.0
        %838 = vmatprep.mubr.f32.mxu0 0.0
        %839 = vmatmul.mubr.f32.gmra.mrb[0].mxu0 %v771
        %v840 = vpop.f32.mrb[0].mxu0
        %v841 = vadd.f32 %v773, %v840
        %v842 = vpop.f32.mrb[0].mxu0
        %v843 = vadd.f32 %v773, %v842
        %844 = vdwg.mxu0
        %vm845 = vcmp.ge.f32.partialorder %v841, 0.0
        %vm846 = vcmp.ge.f32.partialorder %v843, 0.0
        %v847 = vmul.f32 %v841, 0.1
        %v848 = vmul.f32 %v843, 0.1
        %v849 = vsel %vm845, %v841, %v847
        %v850 = vsel %vm846, %v843, %v848
        %v851 = vsub.f32 %v849, 0.4
        %v852 = vsub.f32 %v850, 0.4
        %s853 = scalar_lea.vmem %s265, 112
        %v854 = vld [vmem:[%s853] sm:$0xff]
        %v855 = vld [vmem:[%s853 + $0x8] sm:$0xff]
        %v856 = vld [vmem:[%s853 + $0x10] sm:$0xff]
        %v857 = vld [vmem:[%s853 + $0x18] sm:$0xff]
        %v858 = vld [vmem:[%s853 + $0x20] sm:$0xff]
        %v859 = vld [vmem:[%s853 + $0x28] sm:$0xff]
        %v860 = vld [vmem:[%s853 + $0x30] sm:$0xff]
        %v861 = vld [vmem:[%s853 + $0x38] sm:$0xff]
        %v862 = vld [vmem:[%s853 + $0x40] sm:$0xff]
        %v863 = vld [vmem:[%s853 + $0x48] sm:$0xff]
        %v864 = vld [vmem:[%s853 + $0x50] sm:$0xff]
        %v865 = vld [vmem:[%s853 + $0x58] sm:$0xff]
        %v866 = vld [vmem:[%s853 + $0x60] sm:$0xff]
        %v867 = vld [vmem:[%s853 + $0x68] sm:$0xff]
        %s868 = scalar_lea.vmem %s1, 64
        %v869 = vld [vmem:[%s868] sm:$0xf]
        %v870 = vld [vmem:[%s868 + $0x4] sm:$0xf]
        %v871 = vld [vmem:[%s868 + $0x8] sm:$0xf]
        %v872 = vld [vmem:[%s868 + $0xc] sm:$0xf]
        %v873 = vld [vmem:[%s868 + $0x10] sm:$0xf]
        %v874 = vld [vmem:[%s868 + $0x14] sm:$0xf]
        %v875 = vld [vmem:[%s868 + $0x18] sm:$0xf]
        %v876 = vld [vmem:[%s868 + $0x1c] sm:$0xf]
        %v877 = vld [vmem:[%s868 + $0x20] sm:$0xf]
        %v878 = vld [vmem:[%s868 + $0x24] sm:$0xf]
        %v879 = vld [vmem:[%s868 + $0x28] sm:$0xf]
        %v880 = vld [vmem:[%s868 + $0x2c] sm:$0xf]
        %v881 = vld [vmem:[%s868 + $0x30] sm:$0xf]
        %v882 = vld [vmem:[%s868 + $0x34] sm:$0xf]
        %v883 = vld [vmem:[%s868 + $0x38] sm:$0xf]
        %v884 = vld [vmem:[%s868 + $0x3c] sm:$0xf]
        %s885 = scalar_lea.vmem %s2, 128
        %v886 = vld [vmem:[%s885] sm:$0xff]
        %v887 = vld [vmem:[%s885 + $0x8] sm:$0xff]
        %v888 = vld [vmem:[%s885 + $0x10] sm:$0xff]
        %v889 = vld [vmem:[%s885 + $0x18] sm:$0xff]
        %v890 = vld [vmem:[%s885 + $0x20] sm:$0xff]
        %v891 = vld [vmem:[%s885 + $0x28] sm:$0xff]
        %v892 = vld [vmem:[%s885 + $0x30] sm:$0xff]
        %v893 = vld [vmem:[%s885 + $0x38] sm:$0xff]
        %v894 = vld [vmem:[%s885 + $0x40] sm:$0xff]
        %v895 = vld [vmem:[%s885 + $0x48] sm:$0xff]
        %v896 = vld [vmem:[%s885 + $0x50] sm:$0xff]
        %v897 = vld [vmem:[%s885 + $0x58] sm:$0xff]
        %v898 = vld [vmem:[%s885 + $0x60] sm:$0xff]
        %v899 = vld [vmem:[%s885 + $0x68] sm:$0xff]
        %v900 = vld [vmem:[%s885 + $0x70] sm:$0xff]
        %v901 = vld [vmem:[%s885 + $0x78] sm:$0xff]
        %903 = vset.pattern.permute.xlu0 0
        %904 = vperm.xlu0 %903, %v886
        %v905 = vpop.permute.xlu0 %904
        %908 = vset.pattern.permute.xlu0 0
        %909 = vperm.xlu0 %908, %v887
        %v910 = vpop.permute.xlu0 %909
        %913 = vset.pattern.permute.xlu0 0
        %914 = vperm.xlu0 %913, %v888
        %v915 = vpop.permute.xlu0 %914
        %918 = vset.pattern.permute.xlu0 0
        %919 = vperm.xlu0 %918, %v889
        %v920 = vpop.permute.xlu0 %919
        %923 = vset.pattern.permute.xlu0 0
        %924 = vperm.xlu0 %923, %v890
        %v925 = vpop.permute.xlu0 %924
        %928 = vset.pattern.permute.xlu0 0
        %929 = vperm.xlu0 %928, %v891
        %v930 = vpop.permute.xlu0 %929
        %933 = vset.pattern.permute.xlu0 0
        %934 = vperm.xlu0 %933, %v892
        %v935 = vpop.permute.xlu0 %934
        %938 = vset.pattern.permute.xlu0 0
        %939 = vperm.xlu0 %938, %v893
        %v940 = vpop.permute.xlu0 %939
        %943 = vset.pattern.permute.xlu0 0
        %944 = vperm.xlu0 %943, %v894
        %v945 = vpop.permute.xlu0 %944
        %948 = vset.pattern.permute.xlu0 0
        %949 = vperm.xlu0 %948, %v895
        %v950 = vpop.permute.xlu0 %949
        %953 = vset.pattern.permute.xlu0 0
        %954 = vperm.xlu0 %953, %v896
        %v955 = vpop.permute.xlu0 %954
        %958 = vset.pattern.permute.xlu0 0
        %959 = vperm.xlu0 %958, %v897
        %v960 = vpop.permute.xlu0 %959
        %963 = vset.pattern.permute.xlu0 0
        %964 = vperm.xlu0 %963, %v898
        %v965 = vpop.permute.xlu0 %964
        %968 = vset.pattern.permute.xlu0 0
        %969 = vperm.xlu0 %968, %v899
        %v970 = vpop.permute.xlu0 %969
        %973 = vset.pattern.permute.xlu0 0
        %974 = vperm.xlu0 %973, %v900
        %v975 = vpop.permute.xlu0 %974
        %978 = vset.pattern.permute.xlu0 0
        %979 = vperm.xlu0 %978, %v901
        %v980 = vpop.permute.xlu0 %979
        %v998 = vunpack.c.l.b16 %v869
        %v999 = vunpack.c.l.b16 %v870
        %v1000 = vunpack.c.l.b16 %v871
        %v1001 = vunpack.c.l.b16 %v872
        %v1002 = vunpack.c.l.b16 %v873
        %v1003 = vunpack.c.l.b16 %v874
        %v1004 = vunpack.c.l.b16 %v875
        %v1005 = vunpack.c.l.b16 %v876
        %v1006 = vunpack.c.l.b16 %v877
        %v1007 = vunpack.c.l.b16 %v878
        %v1008 = vunpack.c.l.b16 %v879
        %v1009 = vunpack.c.l.b16 %v880
        %v1010 = vunpack.c.l.b16 %v881
        %v1011 = vunpack.c.l.b16 %v882
        %v1012 = vunpack.c.l.b16 %v883
        %v1013 = vunpack.c.l.b16 %v884
        %v1014 = vpack.c.b16 %v999, %v998
        %v1015 = vpack.c.b16 %v1001, %v1000
        %v1016 = vpack.c.b16 %v1003, %v1002
        %v1017 = vpack.c.b16 %v1005, %v1004
        %v1018 = vpack.c.b16 %v1007, %v1006
        %v1019 = vpack.c.b16 %v1009, %v1008
        %v1020 = vpack.c.b16 %v1011, %v1010
        %v1021 = vpack.c.b16 %v1013, %v1012
        %v1036 = vunpack.c.l.b16 %v854
        %v1037 = vunpack.c.h.b16 %v854
        %v1038 = vunpack.c.l.b16 %v855
        %v1039 = vunpack.c.h.b16 %v855
        %v1040 = vunpack.c.l.b16 %v856
        %v1041 = vunpack.c.h.b16 %v856
        %v1042 = vunpack.c.l.b16 %v857
        %v1043 = vunpack.c.h.b16 %v857
        %v1044 = vunpack.c.l.b16 %v858
        %v1045 = vunpack.c.h.b16 %v858
        %v1046 = vunpack.c.l.b16 %v859
        %v1047 = vunpack.c.h.b16 %v859
        %v1048 = vunpack.c.l.b16 %v860
        %v1049 = vunpack.c.h.b16 %v860
        %v1050 = vunpack.c.l.b16 %v861
        %v1051 = vunpack.c.h.b16 %v861
        %v1052 = vunpack.c.l.b16 %v862
        %v1053 = vunpack.c.h.b16 %v862
        %v1054 = vunpack.c.l.b16 %v863
        %v1055 = vunpack.c.h.b16 %v863
        %v1056 = vunpack.c.l.b16 %v864
        %v1057 = vunpack.c.h.b16 %v864
        %v1058 = vunpack.c.l.b16 %v865
        %v1059 = vunpack.c.h.b16 %v865
        %v1060 = vunpack.c.l.b16 %v866
        %v1061 = vunpack.c.h.b16 %v866
        %v1062 = vunpack.c.l.b16 %v867
        %v1063 = vunpack.c.h.b16 %v867
        %v1064 = vpack.c.b16 %v1038, %v1036
        %v1065 = vpack.c.b16 %v1039, %v1037
        %v1066 = vpack.c.b16 %v1042, %v1040
        %v1067 = vpack.c.b16 %v1043, %v1041
        %v1068 = vpack.c.b16 %v1046, %v1044
        %v1069 = vpack.c.b16 %v1047, %v1045
        %v1070 = vpack.c.b16 %v1050, %v1048
        %v1071 = vpack.c.b16 %v1051, %v1049
        %v1072 = vpack.c.b16 %v1054, %v1052
        %v1073 = vpack.c.b16 %v1055, %v1053
        %v1074 = vpack.c.b16 %v1058, %v1056
        %v1075 = vpack.c.b16 %v1059, %v1057
        %v1076 = vpack.c.b16 %v1062, %v1060
        %v1077 = vpack.c.b16 %v1063, %v1061
        %v1093 = vsel %vm505, %v1014, 0
        %v1096 = vsel %vm505, %v1015, 0
        %v1099 = vsel %vm505, %v1016, 0
        %v1102 = vsel %vm505, %v1017, 0
        %v1105 = vsel %vm505, %v1018, 0
        %v1108 = vsel %vm505, %v1019, 0
        %v1111 = vsel %vm505, %v1020, 0
        %v1114 = vsel %vm505, %v1021, 0
        %1116 = vmatprep.subr.bf16.mxu0 %v1065
        %1117 = vmatpush1.bf16.msra.mxu0 %v1064
        %1118 = vmatprep.subr.bf16.mxu0 %v1067
        %1119 = vmatpush1.bf16.msra.mxu0 %v1066
        %1120 = vmatprep.subr.bf16.mxu0 %v1069
        %1121 = vmatpush1.bf16.msra.mxu0 %v1068
        %1122 = vmatprep.subr.bf16.mxu0 %v1071
        %1123 = vmatpush1.bf16.msra.mxu0 %v1070
        %1124 = vmatprep.subr.bf16.mxu0 %v1073
        %1125 = vmatpush1.bf16.msra.mxu0 %v1072
        %1126 = vmatprep.subr.bf16.mxu0 %v1075
        %1127 = vmatpush1.bf16.msra.mxu0 %v1074
        %1128 = vmatprep.subr.bf16.mxu0 %v1077
        %1129 = vmatpush1.bf16.msra.mxu0 %v1076
        %1130 = vmatprep.subr.bf16.mxu0 0
        %1131 = vmatpush1.bf16.msra.mxu0 0
        %1132 = vmatprep.subr.bf16.mxu0 0
        %1133 = vmatpush1.bf16.msra.mxu0 0
        %1134 = vmatprep.subr.bf16.mxu0 0
        %1135 = vmatpush1.bf16.msra.mxu0 0
        %1136 = vmatprep.subr.bf16.mxu0 0
        %1137 = vmatpush1.bf16.msra.mxu0 0
        %1138 = vmatprep.subr.bf16.mxu0 0
        %1139 = vmatpush1.bf16.msra.mxu0 0
        %1140 = vmatprep.subr.bf16.mxu0 0
        %1141 = vmatpush1.bf16.msra.mxu0 0
        %1142 = vmatprep.subr.bf16.mxu0 0
        %1143 = vmatpush1.bf16.msra.mxu0 0
        %1144 = vmatprep.subr.bf16.mxu0 0
        %1145 = vmatpush1.bf16.msra.mxu0 0
        %1146 = vmatprep.subr.bf16.mxu0 0
        %1147 = vmatpush1.bf16.msra.mxu0 0
        %1148 = vmatprep.mubr.bf16.mxu0 0
        %1149 = vmatmul.mubr.bf16.gmra.mrb[0].mxu0 %v1093
        %v1150 = vpop.f32.mrb[0].mxu0
        %v1151 = vadd.f32 %v905, %v1150
        %v1152 = vpop.f32.mrb[0].mxu0
        %v1153 = vadd.f32 %v905, %v1152
        %v1154 = vpop.f32.mrb[0].mxu0
        %v1155 = vadd.f32 %v910, %v1154
        %v1156 = vpop.f32.mrb[0].mxu0
        %v1157 = vadd.f32 %v910, %v1156
        %1158 = vmatprep.mubr.bf16.mxu0 0
        %1159 = vmatmul.mubr.bf16.gmra.mrb[0].mxu0 %v1096
        %v1160 = vpop.f32.mrb[0].mxu0
        %v1161 = vadd.f32 %v915, %v1160
        %v1162 = vpop.f32.mrb[0].mxu0
        %v1163 = vadd.f32 %v915, %v1162
        %v1164 = vpop.f32.mrb[0].mxu0
        %v1165 = vadd.f32 %v920, %v1164
        %v1166 = vpop.f32.mrb[0].mxu0
        %v1167 = vadd.f32 %v920, %v1166
        %1168 = vmatprep.mubr.bf16.mxu0 0
        %1169 = vmatmul.mubr.bf16.gmra.mrb[0].mxu0 %v1099
        %v1170 = vpop.f32.mrb[0].mxu0
        %v1171 = vadd.f32 %v925, %v1170
        %v1172 = vpop.f32.mrb[0].mxu0
        %v1173 = vadd.f32 %v925, %v1172
        %v1174 = vpop.f32.mrb[0].mxu0
        %v1175 = vadd.f32 %v930, %v1174
        %v1176 = vpop.f32.mrb[0].mxu0
        %v1177 = vadd.f32 %v930, %v1176
        %1178 = vmatprep.mubr.bf16.mxu0 0
        %1179 = vmatmul.mubr.bf16.gmra.mrb[0].mxu0 %v1102
        %v1180 = vpop.f32.mrb[0].mxu0
        %v1181 = vadd.f32 %v935, %v1180
        %v1182 = vpop.f32.mrb[0].mxu0
        %v1183 = vadd.f32 %v935, %v1182
        %v1184 = vpop.f32.mrb[0].mxu0
        %v1185 = vadd.f32 %v940, %v1184
        %v1186 = vpop.f32.mrb[0].mxu0
        %v1187 = vadd.f32 %v940, %v1186
        %1188 = vmatprep.mubr.bf16.mxu0 0
        %1189 = vmatmul.mubr.bf16.gmra.mrb[0].mxu0 %v1105
        %v1190 = vpop.f32.mrb[0].mxu0
        %v1191 = vadd.f32 %v945, %v1190
        %v1192 = vpop.f32.mrb[0].mxu0
        %v1193 = vadd.f32 %v945, %v1192
        %v1194 = vpop.f32.mrb[0].mxu0
        %v1195 = vadd.f32 %v950, %v1194
        %v1196 = vpop.f32.mrb[0].mxu0
        %v1197 = vadd.f32 %v950, %v1196
        %1198 = vmatprep.mubr.bf16.mxu0 0
        %1199 = vmatmul.mubr.bf16.gmra.mrb[0].mxu0 %v1108
        %v1200 = vpop.f32.mrb[0].mxu0
        %v1201 = vadd.f32 %v955, %v1200
        %v1202 = vpop.f32.mrb[0].mxu0
        %v1203 = vadd.f32 %v955, %v1202
        %v1204 = vpop.f32.mrb[0].mxu0
        %v1205 = vadd.f32 %v960, %v1204
        %v1206 = vpop.f32.mrb[0].mxu0
        %v1207 = vadd.f32 %v960, %v1206
        %1208 = vmatprep.mubr.bf16.mxu0 0
        %1209 = vmatmul.mubr.bf16.gmra.mrb[0].mxu0 %v1111
        %v1210 = vpop.f32.mrb[0].mxu0
        %v1211 = vadd.f32 %v965, %v1210
        %v1212 = vpop.f32.mrb[0].mxu0
        %v1213 = vadd.f32 %v965, %v1212
        %v1214 = vpop.f32.mrb[0].mxu0
        %v1215 = vadd.f32 %v970, %v1214
        %v1216 = vpop.f32.mrb[0].mxu0
        %v1217 = vadd.f32 %v970, %v1216
        %1218 = vmatprep.mubr.bf16.mxu0 0
        %1219 = vmatmul.mubr.bf16.gmra.mrb[0].mxu0 %v1114
        %v1220 = vpop.f32.mrb[0].mxu0
        %v1221 = vadd.f32 %v975, %v1220
        %v1222 = vpop.f32.mrb[0].mxu0
        %v1223 = vadd.f32 %v975, %v1222
        %v1224 = vpop.f32.mrb[0].mxu0
        %v1225 = vadd.f32 %v980, %v1224
        %v1226 = vpop.f32.mrb[0].mxu0
        %v1227 = vadd.f32 %v980, %v1226
        %1228 = vdwg.mxu0
        %vm1229 = vcmp.ge.f32.partialorder %v1151, 0.0
        %vm1230 = vcmp.ge.f32.partialorder %v1153, 0.0
        %vm1231 = vcmp.ge.f32.partialorder %v1155, 0.0
        %vm1232 = vcmp.ge.f32.partialorder %v1157, 0.0
        %vm1233 = vcmp.ge.f32.partialorder %v1161, 0.0
        %vm1234 = vcmp.ge.f32.partialorder %v1163, 0.0
        %vm1235 = vcmp.ge.f32.partialorder %v1165, 0.0
        %vm1236 = vcmp.ge.f32.partialorder %v1167, 0.0
        %vm1237 = vcmp.ge.f32.partialorder %v1171, 0.0
        %vm1238 = vcmp.ge.f32.partialorder %v1173, 0.0
        %vm1239 = vcmp.ge.f32.partialorder %v1175, 0.0
        %vm1240 = vcmp.ge.f32.partialorder %v1177, 0.0
        %vm1241 = vcmp.ge.f32.partialorder %v1181, 0.0
        %vm1242 = vcmp.ge.f32.partialorder %v1183, 0.0
        %vm1243 = vcmp.ge.f32.partialorder %v1185, 0.0
        %vm1244 = vcmp.ge.f32.partialorder %v1187, 0.0
        %vm1245 = vcmp.ge.f32.partialorder %v1191, 0.0
        %vm1246 = vcmp.ge.f32.partialorder %v1193, 0.0
        %vm1247 = vcmp.ge.f32.partialorder %v1195, 0.0
        %vm1248 = vcmp.ge.f32.partialorder %v1197, 0.0
        %vm1249 = vcmp.ge.f32.partialorder %v1201, 0.0
        %vm1250 = vcmp.ge.f32.partialorder %v1203, 0.0
        %vm1251 = vcmp.ge.f32.partialorder %v1205, 0.0
        %vm1252 = vcmp.ge.f32.partialorder %v1207, 0.0
        %vm1253 = vcmp.ge.f32.partialorder %v1211, 0.0
        %vm1254 = vcmp.ge.f32.partialorder %v1213, 0.0
        %vm1255 = vcmp.ge.f32.partialorder %v1215, 0.0
        %vm1256 = vcmp.ge.f32.partialorder %v1217, 0.0
        %vm1257 = vcmp.ge.f32.partialorder %v1221, 0.0
        %vm1258 = vcmp.ge.f32.partialorder %v1223, 0.0
        %vm1259 = vcmp.ge.f32.partialorder %v1225, 0.0
        %vm1260 = vcmp.ge.f32.partialorder %v1227, 0.0
        %v1261 = vmul.f32 %v1151, 0.1
        %v1262 = vmul.f32 %v1153, 0.1
        %v1263 = vmul.f32 %v1155, 0.1
        %v1264 = vmul.f32 %v1157, 0.1
        %v1265 = vmul.f32 %v1161, 0.1
        %v1266 = vmul.f32 %v1163, 0.1
        %v1267 = vmul.f32 %v1165, 0.1
        %v1268 = vmul.f32 %v1167, 0.1
        %v1269 = vmul.f32 %v1171, 0.1
        %v1270 = vmul.f32 %v1173, 0.1
        %v1271 = vmul.f32 %v1175, 0.1
        %v1272 = vmul.f32 %v1177, 0.1
        %v1273 = vmul.f32 %v1181, 0.1
        %v1274 = vmul.f32 %v1183, 0.1
        %v1275 = vmul.f32 %v1185, 0.1
        %v1276 = vmul.f32 %v1187, 0.1
        %v1277 = vmul.f32 %v1191, 0.1
        %v1278 = vmul.f32 %v1193, 0.1
        %v1279 = vmul.f32 %v1195, 0.1
        %v1280 = vmul.f32 %v1197, 0.1
        %v1281 = vmul.f32 %v1201, 0.1
        %v1282 = vmul.f32 %v1203, 0.1
        %v1283 = vmul.f32 %v1205, 0.1
        %v1284 = vmul.f32 %v1207, 0.1
        %v1285 = vmul.f32 %v1211, 0.1
        %v1286 = vmul.f32 %v1213, 0.1
        %v1287 = vmul.f32 %v1215, 0.1
        %v1288 = vmul.f32 %v1217, 0.1
        %v1289 = vmul.f32 %v1221, 0.1
        %v1290 = vmul.f32 %v1223, 0.1
        %v1291 = vmul.f32 %v1225, 0.1
        %v1292 = vmul.f32 %v1227, 0.1
        %v1293 = vsel %vm1229, %v1151, %v1261
        %v1294 = vsel %vm1230, %v1153, %v1262
        %v1295 = vsel %vm1231, %v1155, %v1263
        %v1296 = vsel %vm1232, %v1157, %v1264
        %v1297 = vsel %vm1233, %v1161, %v1265
        %v1298 = vsel %vm1234, %v1163, %v1266
        %v1299 = vsel %vm1235, %v1165, %v1267
        %v1300 = vsel %vm1236, %v1167, %v1268
        %v1301 = vsel %vm1237, %v1171, %v1269
        %v1302 = vsel %vm1238, %v1173, %v1270
        %v1303 = vsel %vm1239, %v1175, %v1271
        %v1304 = vsel %vm1240, %v1177, %v1272
        %v1305 = vsel %vm1241, %v1181, %v1273
        %v1306 = vsel %vm1242, %v1183, %v1274
        %v1307 = vsel %vm1243, %v1185, %v1275
        %v1308 = vsel %vm1244, %v1187, %v1276
        %v1309 = vsel %vm1245, %v1191, %v1277
        %v1310 = vsel %vm1246, %v1193, %v1278
        %v1311 = vsel %vm1247, %v1195, %v1279
        %v1312 = vsel %vm1248, %v1197, %v1280
        %v1313 = vsel %vm1249, %v1201, %v1281
        %v1314 = vsel %vm1250, %v1203, %v1282
        %v1315 = vsel %vm1251, %v1205, %v1283
        %v1316 = vsel %vm1252, %v1207, %v1284
        %v1317 = vsel %vm1253, %v1211, %v1285
        %v1318 = vsel %vm1254, %v1213, %v1286
        %v1319 = vsel %vm1255, %v1215, %v1287
        %v1320 = vsel %vm1256, %v1217, %v1288
        %v1321 = vsel %vm1257, %v1221, %v1289
        %v1322 = vsel %vm1258, %v1223, %v1290
        %v1323 = vsel %vm1259, %v1225, %v1291
        %v1324 = vsel %vm1260, %v1227, %v1292
        %v1325 = vsub.f32 %v1293, 0.4
        %v1326 = vsub.f32 %v1294, 0.4
        %v1327 = vsub.f32 %v1295, 0.4
        %v1328 = vsub.f32 %v1296, 0.4
        %v1329 = vsub.f32 %v1297, 0.4
        %v1330 = vsub.f32 %v1298, 0.4
        %v1331 = vsub.f32 %v1299, 0.4
        %v1332 = vsub.f32 %v1300, 0.4
        %v1333 = vsub.f32 %v1301, 0.4
        %v1334 = vsub.f32 %v1302, 0.4
        %v1335 = vsub.f32 %v1303, 0.4
        %v1336 = vsub.f32 %v1304, 0.4
        %v1337 = vsub.f32 %v1305, 0.4
        %v1338 = vsub.f32 %v1306, 0.4
        %v1339 = vsub.f32 %v1307, 0.4
        %v1340 = vsub.f32 %v1308, 0.4
        %v1341 = vsub.f32 %v1309, 0.4
        %v1342 = vsub.f32 %v1310, 0.4
        %v1343 = vsub.f32 %v1311, 0.4
        %v1344 = vsub.f32 %v1312, 0.4
        %v1345 = vsub.f32 %v1313, 0.4
        %v1346 = vsub.f32 %v1314, 0.4
        %v1347 = vsub.f32 %v1315, 0.4
        %v1348 = vsub.f32 %v1316, 0.4
        %v1349 = vsub.f32 %v1317, 0.4
        %v1350 = vsub.f32 %v1318, 0.4
        %v1351 = vsub.f32 %v1319, 0.4
        %v1352 = vsub.f32 %v1320, 0.4
        %v1353 = vsub.f32 %v1321, 0.4
        %v1354 = vsub.f32 %v1322, 0.4
        %v1355 = vsub.f32 %v1323, 0.4
        %v1356 = vsub.f32 %v1324, 0.4
        %s1357 = scalar_lea.vmem %s3, 1
        %v1358 = vld [vmem:[%s1357] sm:$0x1]
        %s1359 = sld [smem:[#allocation2 + $0x1]]
        %v1360 = vstv %s1359
        %1361 = vmatprep.subr.mxu0 %v1326
        %1362 = vmatpush1.msra.mxu0 %v1325
        %1363 = vmatprep.subr.mxu0 %v1328
        %1364 = vmatpush1.msra.mxu0 %v1327
        %1365 = vmatprep.subr.mxu0 %v1330
        %1366 = vmatpush1.msra.mxu0 %v1329
        %1367 = vmatprep.subr.mxu0 %v1332
        %1368 = vmatpush1.msra.mxu0 %v1331
        %1369 = vmatprep.subr.mxu0 %v1334
        %1370 = vmatpush1.msra.mxu0 %v1333
        %1371 = vmatprep.subr.mxu0 %v1336
        %1372 = vmatpush1.msra.mxu0 %v1335
        %1373 = vmatprep.subr.mxu0 %v1338
        %1374 = vmatpush1.msra.mxu0 %v1337
        %1375 = vmatprep.subr.mxu0 %v1340
        %1376 = vmatpush1.msra.mxu0 %v1339
        %1377 = vmatprep.subr.mxu0 %v1342
        %1378 = vmatpush1.msra.mxu0 %v1341
        %1379 = vmatprep.subr.mxu0 %v1344
        %1380 = vmatpush1.msra.mxu0 %v1343
        %1381 = vmatprep.subr.mxu0 %v1346
        %1382 = vmatpush1.msra.mxu0 %v1345
        %1383 = vmatprep.subr.mxu0 %v1348
        %1384 = vmatpush1.msra.mxu0 %v1347
        %1385 = vmatprep.subr.mxu0 %v1350
        %1386 = vmatpush1.msra.mxu0 %v1349
        %1387 = vmatprep.subr.mxu0 %v1352
        %1388 = vmatpush1.msra.mxu0 %v1351
        %1389 = vmatprep.subr.mxu0 %v1354
        %1390 = vmatpush1.msra.mxu0 %v1353
        %1391 = vmatprep.subr.mxu0 %v1356
        %1392 = vmatpush1.msra.mxu0 %v1355
        %1393 = vmatprep.subr.mxu0 0.0
        %1394 = vmatpush1.msra.mxu0 0.0
        %1395 = vmatprep.subr.mxu0 0.0
        %1396 = vmatpush1.msra.mxu0 0.0
        %1397 = vmatprep.subr.mxu0 0.0
        %1398 = vmatpush1.msra.mxu0 0.0
        %1399 = vmatprep.subr.mxu0 0.0
        %1400 = vmatpush1.msra.mxu0 0.0
        %1401 = vmatprep.subr.mxu0 0.0
        %1402 = vmatpush1.msra.mxu0 0.0
        %1403 = vmatprep.subr.mxu0 0.0
        %1404 = vmatpush1.msra.mxu0 0.0
        %1405 = vmatprep.subr.mxu0 0.0
        %1406 = vmatpush1.msra.mxu0 0.0
        %1407 = vmatprep.subr.mxu0 0.0
        %1408 = vmatpush1.msra.mxu0 0.0
        %1409 = vmatprep.subr.mxu0 0.0
        %1410 = vmatpush1.msra.mxu0 0.0
        %1411 = vmatprep.subr.mxu0 0.0
        %1412 = vmatpush1.msra.mxu0 0.0
        %1413 = vmatprep.subr.mxu0 0.0
        %1414 = vmatpush1.msra.mxu0 0.0
        %1415 = vmatprep.subr.mxu0 0.0
        %1416 = vmatpush1.msra.mxu0 0.0
        %1417 = vmatprep.subr.mxu0 0.0
        %1418 = vmatpush1.msra.mxu0 0.0
        %1419 = vmatprep.subr.mxu0 0.0
        %1420 = vmatpush1.msra.mxu0 0.0
        %1421 = vmatprep.subr.mxu0 0.0
        %1422 = vmatpush1.msra.mxu0 0.0
        %1423 = vmatprep.subr.mxu0 0.0
        %1424 = vmatpush1.msra.mxu0 0.0
        %1425 = vmatprep.mubr.f32.mxu0 0.0
        %1426 = vmatmul.mubr.f32.gmra.mrb[0].mxu0 %v1358
        %v1427 = vpop.f32.mrb[0].mxu0
        %v1428 = vadd.f32 %v1360, %v1427
        %v1429 = vpop.f32.mrb[0].mxu0
        %v1430 = vadd.f32 %v1360, %v1429
        %1431 = vdwg.mxu0
        %vm1432 = vcmp.ge.f32.partialorder %v1428, 0.0
        %vm1433 = vcmp.ge.f32.partialorder %v1430, 0.0
        %v1434 = vmul.f32 %v1428, 0.1
        %v1435 = vmul.f32 %v1430, 0.1
        %v1436 = vsel %vm1432, %v1428, %v1434
        %v1437 = vsel %vm1433, %v1430, %v1435
        %v1438 = vsub.f32 %v1436, 0.4
        %v1439 = vsub.f32 %v1437, 0.4
        %v1442 = vrot.slane %v1438, 7
        %v1443 = vrot.slane %v1439, 7
        %vm1446 = vcmask 1040384
        %v1447 = vsel %vm1446, %v851, %v1442
        %v1448 = vsel %vm1446, %v852, %v1443
        %v1451 = vcombine.low %v1447, %v1448
        %v1453 = vunpack.c.l.s4 1983009808
        %v1454 = vunpack.c.0.s8 %v1453
        %v1455 = vlaneseq
        %v1456 = vshrl.u32 %v1455, 7
        %v1457 = vsub.s32 %v1454, %v1456
        %v1458 = vrot.slane %v1451, %v1457
        %1460 = vst [vmem:[%s256] sm:$0xf] %v1458
        %s1461 = sand.u32 %s154, 1
        %s1462 = scalar_lea.sflag [#allocation3], %s1461
        %s1463 = sand.u32 %s154, 1
        %s1464 = smul.addr %s1463, 4
        %s1465 = scalar_lea.vmem [#allocation5], %s1464
        // Predicated region
        $region45: #{tpu_custom_call.1} parent=39 // pred_check
          %p1466 = pneg %p164
        $region46: #{tpu_custom_call.1} parent=39 // pred_check_branch
          %1468 = sbr.rel (%p1466) target = $region48
        $region47: #{tpu_custom_call.1} parent=39 // pred_region
          %s1469 = smul.u32 2, %s25
          %s1471 = ssub.s32 64, 64
          %1472 = vsyncadd %s1462, %s1471
          %s1473 = smul.addr %s24, 2
          %s1474 = sadd.s32 %s1469, %s1473
          %s1475 = smul.addr %s1474, 32
          %s1476 = scalar_lea.hbm %s5, %s1475
          %s1478 = sshll.u32 %s1465, 4
          %s1479 = int_to_ptr.vmem [resolvable:$true] %s1478
          %1481 = dma.vmem_to_hbm [thread:$0]  %s1479, 64, %s1476, %s1462
        $region48: #{tpu_custom_call.1} parent=39 // pred_fallthru
          _
      $region40: #{tpu_custom_call.1} parent=5 // pred_fallthru
        _
      %p1482 = scmp.le.s32.totalorder 2, %s15
      // Predicated region
      $region49: #{tpu_custom_call.1} parent=5 // pred_check
        %p1483 = pneg %p1482
      $region50: #{tpu_custom_call.1} parent=5 // pred_check_branch
        %1485 = sbr.rel (%p1483) target = $region52
      $region51: #{tpu_custom_call.1} parent=5 // pred_region
        %s1486 = ssub.s32 %s15, 2
        // Predicated region
        $region53: #{tpu_custom_call.1} parent=51 // pred_check
          %p1487 = pneg %p170
        $region54: #{tpu_custom_call.1} parent=51 // pred_check_branch
          %1489 = sbr.rel (%p1487) target = $region56
        $region55: #{tpu_custom_call.1} parent=51 // pred_region
          %s1490 = sand.u32 %s155, 1
          %s1491 = scalar_lea.sflag [#allocation3], %s1490
          %s1492 = sand.u32 %s155, 1
          %s1493 = smul.addr %s1492, 4
          %s1494 = scalar_lea.vmem [#allocation5], %s1493
          %1495 = dma.done %s1491, 64
        $region56: #{tpu_custom_call.1} parent=51 // pred_fallthru
          _
      $region52: #{tpu_custom_call.1} parent=5 // pred_fallthru
        _
    $region6: #{tpu_custom_call.1} parent=1 // loop_footer
      %s19 = sadd.s32 1, %s15
    $region7: #{tpu_custom_call.1} parent=1 // loop_footer_branch
      %14 = sbr.rel target = $region3
    $region8: #{tpu_custom_call.1} parent=1 // loop_exit
      _
    %1496 = vsyncpa [#allocation3], 1
    %s1497 = scalar_lea.sflag [#allocation3], 1
    %1498 = vsyncpa %s1497, 1
    %1499 = vsyncpa [#allocation4], 1
    %s1500 = scalar_lea.sflag [#allocation4], 1
    %1501 = vsyncpa %s1500, 1

</llo_original>
